<compile_context>
chip_gen: v7x
topology: tpu7x:2x2x1
jax: 0.10.0
libtpu: 0.0.40
codegen_flags: <defaults>
</compile_context>

<pallas_src>
import functools

import jax
import jax.numpy as jnp
from jax.experimental import pallas as pl
from jax.experimental.pallas import tpu as pltpu

IN_FEATURES = 28 * 28   # 784 (kept un-padded: K padding costs MXU time on v5e)
HID = 500
HID_PAD = 512           # 500 rounded up to a multiple of 128 (zero pad -> exact)
OUT = 10
OUT_PAD = 128           # lane-dense compute width for the second matmul / softmax


def netfull_kernel(x_ref, w1_ref, b1_ref, w2_ref, b2_ref, o_ref):
    # x_ref:  (TB, 784) f32       w1_ref: (784, 512) bf16   b1_ref: (1, 512) f32
    # w2_ref: (512, 128) bf16     b2_ref: (1, 128)  f32     o_ref:  (TB, 10) f32
    # Cast streamed f32 activations to bf16 in VMEM (cheap VPU op, hidden under DMA).
    x = x_ref[...].astype(jnp.bfloat16)

    # first_lin + tanh: bf16 MXU matmul, f32 accumulate, f32 tanh (VPU/EUP).
    h = jnp.dot(x, w1_ref[...], preferred_element_type=jnp.float32)
    h = jnp.tanh(h + b1_ref[...])

    # second_lin on a full 128-lane N. Padded bias columns hold -1e30 so the
    # 118 fake logits contribute exp(-huge) == 0 to the normalizer.
    logits = jnp.dot(h.astype(jnp.bfloat16), w2_ref[...],
                     preferred_element_type=jnp.float32) + b2_ref[...]

    # Numerically stable log_softmax over the padded 128-wide tile (f32),
    # then store only the 10 real logit columns (masked store, 12x less HBM).
    m = jnp.max(logits, axis=1, keepdims=True)
    z = logits - m
    lse = jnp.log(jnp.sum(jnp.exp(z), axis=1, keepdims=True))
    o_ref[...] = (z - lse)[:, :OUT].astype(o_ref.dtype)


def prepare_params(w1, b1, w2, b2):
    """Pad + cast PyTorch-style params once, outside the kernel.

    w1: (784, 500), b1: (500,), w2: (500, 10), b2: (10,)  (all f32, already laid
    out as (in, out) so the kernel does plain row-major matmuls == x @ W.T).
    Only the hidden/out dims are padded (zeros / -1e30); K stays 784 (exact).
    """
    w1p = jnp.zeros((IN_FEATURES, HID_PAD), jnp.bfloat16)
    w1p = w1p.at[:, :HID].set(w1.astype(jnp.bfloat16))
    b1p = jnp.zeros((1, HID_PAD), jnp.float32).at[:, :HID].set(b1.reshape(1, HID))

    w2p = jnp.zeros((HID_PAD, OUT_PAD), jnp.bfloat16)
    w2p = w2p.at[:HID, :OUT].set(w2.astype(jnp.bfloat16))
    # Padded logit columns get a huge negative bias -> excluded from log-softmax.
    b2p = jnp.full((1, OUT_PAD), -1e30, jnp.float32).at[:, :OUT].set(b2.reshape(1, OUT))
    return w1p, b1p, w2p, b2p


def _round_up(x, m):
    return ((x + m - 1) // m) * m


def _choose_batch_tile(B, tb):
    """Batch tile: big (amortize ~0.35us/step), 16-row granular, >=2 steps for v7x."""
    tile = min(tb, _round_up(B, 16))              # never (much) beyond the batch
    if B > 512:
        # Keep at least 2 grid steps so both v7x TensorCores get work.
        tile = min(tile, _round_up(-(-B // 2), 256))
    return max(16, _round_up(tile, 16))


@functools.partial(jax.jit, static_argnames=("tb",))
def netfull_forward(x_nchw, w1p, b1p, w2p, b2p, *, tb=2048):
    """x_nchw: (B, 1, 28, 28) float32 -> (B, 10) log-probabilities (float32)."""
    B = x_nchw.shape[0]
    x = x_nchw.reshape(B, IN_FEATURES)            # free reshape: no cast, no pad, no copy

    TB = _choose_batch_tile(B, tb)
    grid = pl.cdiv(B, TB)                         # partial final block handles ragged tail

    resident = lambda i: (0, 0)   # weights/biases: same block every step -> stay in VMEM

    # VMEM budget from the actual tile sizes (v7x has only 64 MiB physical VMEM).
    vmem_bytes = (
        2 * TB * IN_FEATURES * 4                                # x tiles (f32, 2 bufs)
        + 2 * TB * OUT_PAD * 4                                  # out tiles (lane-padded)
        + 2 * (IN_FEATURES * HID_PAD * 2 + HID_PAD * 4
               + HID_PAD * OUT_PAD * 2 + OUT_PAD * 4)           # resident weights/biases
        + TB * HID_PAD * (4 + 2)                                # hidden f32 + bf16 copy
        + 4 * TB * OUT_PAD * 4                                  # logits / softmax temps
    )
    vmem_limit = int(min(max(1.5 * vmem_bytes, 32 << 20), 56 << 20))

    out = pl.pallas_call(
        netfull_kernel,
        out_shape=jax.ShapeDtypeStruct((B, OUT), jnp.float32),
        grid_spec=pltpu.PrefetchScalarGridSpec(
            num_scalar_prefetch=0,
            grid=(grid,),
            in_specs=[
                pl.BlockSpec((TB, IN_FEATURES), lambda i: (i, 0)),   # streamed f32 acts
                pl.BlockSpec((IN_FEATURES, HID_PAD), resident),
                pl.BlockSpec((1, HID_PAD), resident),
                pl.BlockSpec((HID_PAD, OUT_PAD), resident),
                pl.BlockSpec((1, OUT_PAD), resident),
            ],
            out_specs=pl.BlockSpec((TB, OUT), lambda i: (i, 0)),     # narrow (B, 10) output
        ),
        compiler_params=pltpu.CompilerParams(
            dimension_semantics=("parallel",),    # shard batch tiles across v7x's 2 TCs
            vmem_limit_bytes=vmem_limit,
        ),
    )(x, w1p, b1p, w2p, b2p)

    return out


def init_params(key):
    """Deterministic init mimicking nn.Linear's default U(-1/sqrt(fan_in), +1/sqrt(fan_in))."""
    k1, k2, k3, k4 = jax.random.split(key, 4)
    bound1 = 1.0 / jnp.sqrt(784.0)
    bound2 = 1.0 / jnp.sqrt(500.0)
    w1 = jax.random.uniform(k1, (IN_FEATURES, HID), jnp.float32, -bound1, bound1)
    b1 = jax.random.uniform(k2, (HID,), jnp.float32, -bound1, bound1)
    w2 = jax.random.uniform(k3, (HID, OUT), jnp.float32, -bound2, bound2)
    b2 = jax.random.uniform(k4, (OUT,), jnp.float32, -bound2, bound2)
    return w1, b1, w2, b2


def reference_forward_f32(x_nchw, w1, b1, w2, b2):
    """Pure-JAX f32 reference (matches the PyTorch module)."""
    x = x_nchw.reshape(x_nchw.shape[0], IN_FEATURES)
    h = jnp.tanh(x @ w1 + b1)
    return jax.nn.log_softmax(h @ w2 + b2, axis=1)


def reference_forward_bf16(x_nchw, w1, b1, w2, b2):
    """Pure-JAX reference with the same bf16-operand / f32-accumulate numerics."""
    x = x_nchw.reshape(x_nchw.shape[0], IN_FEATURES).astype(jnp.bfloat16)
    h = jnp.dot(x, w1.astype(jnp.bfloat16), preferred_element_type=jnp.float32) + b1
    h = jnp.tanh(h)
    logits = jnp.dot(h.astype(jnp.bfloat16), w2.astype(jnp.bfloat16),
                     preferred_element_type=jnp.float32) + b2
    return jax.nn.log_softmax(logits, axis=1)


if __name__ == "__main__":
    key = jax.random.PRNGKey(0)
    kx, kp = jax.random.split(key)

    w1, b1, w2, b2 = init_params(kp)
    w1p, b1p, w2p, b2p = prepare_params(w1, b1, w2, b2)

    # Small demo batch (NCHW like MNIST input): single-tile path.
    B = 16
    x = jax.random.normal(kx, (B, 1, 28, 28), jnp.float32)

    out = netfull_forward(x, w1p, b1p, w2p, b2p)
    out = jax.block_until_ready(out)
    assert out.shape == (B, OUT)

    ref_bf16 = reference_forward_bf16(x, w1, b1, w2, b2)
    ref_f32 = reference_forward_f32(x, w1, b1, w2, b2)
    assert jnp.allclose(out, ref_bf16, atol=1e-3, rtol=1e-3), "mismatch vs bf16 reference"
    assert jnp.allclose(out, ref_f32, atol=5e-2, rtol=5e-2), "mismatch vs f32 reference"

    # Exercise the multi-step grid + partial-final-block path (B not a tile multiple).
    B2 = 40
    x2 = jax.random.normal(jax.random.PRNGKey(1), (B2, 1, 28, 28), jnp.float32)
    out2 = jax.block_until_ready(netfull_forward(x2, w1p, b1p, w2p, b2p, tb=16))
    assert out2.shape == (B2, OUT)
    assert jnp.allclose(out2, reference_forward_bf16(x2, w1, b1, w2, b2),
                        atol=1e-3, rtol=1e-3), "mismatch vs bf16 reference (tiled)"

    print("KERNEL_OK")
</pallas_src>

<mosaic_0001>
module attributes {stable_mosaic.version = 11 : i64} {
  func.func @netfull_kernel(%arg0: i32, %arg1: memref<16x784xf32, #tpu.memory_space<vmem>>, %arg2: memref<784x512xbf16, #tpu.memory_space<vmem>>, %arg3: memref<1x512xf32, #tpu.memory_space<vmem>>, %arg4: memref<512x128xbf16, #tpu.memory_space<vmem>>, %arg5: memref<1x128xf32, #tpu.memory_space<vmem>>, %arg6: memref<16x10xf32, #tpu.memory_space<vmem>>) attributes {dimension_semantics = [#tpu.dimension_semantics<parallel>], iteration_bounds = array<i64: 1>, scalar_prefetch = 0 : i64, scratch_operands = 0 : i64, tpu.core_type = #tpu.core_type<tc>, window_params = [{transform_indices = @transform_0, window_bounds = array<i64: 16, 784>}, {pipeline_mode = #tpu.pipeline_mode<synchronous>, transform_indices = @transform_1, window_bounds = array<i64: 784, 512>}, {pipeline_mode = #tpu.pipeline_mode<synchronous>, transform_indices = @transform_2, window_bounds = array<i64: 1, 512>}, {pipeline_mode = #tpu.pipeline_mode<synchronous>, transform_indices = @transform_3, window_bounds = array<i64: 512, 128>}, {pipeline_mode = #tpu.pipeline_mode<synchronous>, transform_indices = @transform_4, window_bounds = array<i64: 1, 128>}, {transform_indices = @transform_5, window_bounds = array<i64: 16, 10>}]} {
    %c0 = arith.constant 0 : index
    %c0_0 = arith.constant 0 : index
    %0 = vector.load %arg1[%c0, %c0_0] : memref<16x784xf32, #tpu.memory_space<vmem>>, vector<16x784xf32>
    %1 = arith.truncf %0 : vector<16x784xf32> to vector<16x784xbf16>
    %c0_1 = arith.constant 0 : index
    %c0_2 = arith.constant 0 : index
    %2 = vector.load %arg2[%c0_1, %c0_2] : memref<784x512xbf16, #tpu.memory_space<vmem>>, vector<784x512xbf16>
    %cst = arith.constant dense<0.000000e+00> : vector<16x512xf32>
    %3 = tpu.matmul %1, %2, %cst {dimension_numbers = #tpu.dot_dimension_numbers<[1], [0], [0], [1], [0, 0, 1, 1], [], []>} : vector<16x784xbf16>, vector<784x512xbf16>, vector<16x512xf32> -> vector<16x512xf32>
    %c0_3 = arith.constant 0 : index
    %c0_4 = arith.constant 0 : index
    %4 = vector.load %arg3[%c0_3, %c0_4] : memref<1x512xf32, #tpu.memory_space<vmem>>, vector<1x512xf32>
    %5 = vector.broadcast %4 : vector<1x512xf32> to vector<16x512xf32>
    %6 = arith.addf %3, %5 : vector<16x512xf32>
    %7 = math.tanh %6 : vector<16x512xf32>
    %8 = arith.truncf %7 : vector<16x512xf32> to vector<16x512xbf16>
    %c0_5 = arith.constant 0 : index
    %c0_6 = arith.constant 0 : index
    %9 = vector.load %arg4[%c0_5, %c0_6] : memref<512x128xbf16, #tpu.memory_space<vmem>>, vector<512x128xbf16>
    %cst_7 = arith.constant dense<0.000000e+00> : vector<16x128xf32>
    %10 = tpu.matmul %8, %9, %cst_7 {dimension_numbers = #tpu.dot_dimension_numbers<[1], [0], [0], [1], [0, 0, 1, 1], [], []>} : vector<16x512xbf16>, vector<512x128xbf16>, vector<16x128xf32> -> vector<16x128xf32>
    %c0_8 = arith.constant 0 : index
    %c0_9 = arith.constant 0 : index
    %11 = vector.load %arg5[%c0_8, %c0_9] : memref<1x128xf32, #tpu.memory_space<vmem>>, vector<1x128xf32>
    %12 = vector.broadcast %11 : vector<1x128xf32> to vector<16x128xf32>
    %13 = arith.addf %10, %12 : vector<16x128xf32>
    %cst_10 = arith.constant dense<0xFF800000> : vector<16xf32>
    %14 = vector.multi_reduction <maximumf>, %13, %cst_10 [1] : vector<16x128xf32> to vector<16xf32>
    %15 = vector.shape_cast %14 : vector<16xf32> to vector<16x1xf32>
    %16 = vector.broadcast %15 : vector<16x1xf32> to vector<16x128xf32>
    %17 = arith.subf %13, %16 : vector<16x128xf32>
    %18 = math.exp %17 : vector<16x128xf32>
    %cst_11 = arith.constant dense<0.000000e+00> : vector<16xf32>
    %19 = vector.multi_reduction <add>, %18, %cst_11 [1] : vector<16x128xf32> to vector<16xf32>
    %20 = vector.shape_cast %19 : vector<16xf32> to vector<16x1xf32>
    %21 = math.log %20 : vector<16x1xf32>
    %22 = vector.broadcast %21 : vector<16x1xf32> to vector<16x128xf32>
    %23 = arith.subf %17, %22 : vector<16x128xf32>
    %24 = vector.extract_strided_slice %23 {offsets = [0, 0], sizes = [16, 10], strides = [1, 1]} : vector<16x128xf32> to vector<16x10xf32>
    %c0_12 = arith.constant 0 : index
    %c0_13 = arith.constant 0 : index
    %25 = vector.load %arg6[%c0_12, %c0_13] : memref<16x10xf32, #tpu.memory_space<vmem>>, vector<16x10xf32>
    tpu.vector_store %arg6[%c0_12, %c0_13], %24 {strides = array<i32>} : memref<16x10xf32, #tpu.memory_space<vmem>>, vector<16x10xf32>,
    return
  }
  func.func @transform_0(%arg0: i32) -> (i32, i32) {
    %c0_i32 = arith.constant 0 : i32
    %c0_i32_0 = arith.constant 0 : i32
    return %arg0, %c0_i32 : i32, i32
  }
  func.func @transform_1(%arg0: i32) -> (i32, i32) {
    %c0_i32 = arith.constant 0 : i32
    %c0_i32_0 = arith.constant 0 : i32
    %c0_i32_1 = arith.constant 0 : i32
    return %c0_i32, %c0_i32_0 : i32, i32
  }
  func.func @transform_2(%arg0: i32) -> (i32, i32) {
    %c0_i32 = arith.constant 0 : i32
    %c0_i32_0 = arith.constant 0 : i32
    %c0_i32_1 = arith.constant 0 : i32
    return %c0_i32, %c0_i32_0 : i32, i32
  }
  func.func @transform_3(%arg0: i32) -> (i32, i32) {
    %c0_i32 = arith.constant 0 : i32
    %c0_i32_0 = arith.constant 0 : i32
    %c0_i32_1 = arith.constant 0 : i32
    return %c0_i32, %c0_i32_0 : i32, i32
  }
  func.func @transform_4(%arg0: i32) -> (i32, i32) {
    %c0_i32 = arith.constant 0 : i32
    %c0_i32_0 = arith.constant 0 : i32
    %c0_i32_1 = arith.constant 0 : i32
    return %c0_i32, %c0_i32_0 : i32, i32
  }
  func.func @transform_5(%arg0: i32) -> (i32, i32) {
    %c0_i32 = arith.constant 0 : i32
    %c0_i32_0 = arith.constant 0 : i32
    return %arg0, %c0_i32 : i32, i32
  }
}

</mosaic_0001>

<llo_original>
// kernel: netfull_forward.1
$region0: #{netfull_forward.1}
  #allocation0 [shape = 'u32[]', space=smem, size = 0x4, offset = 0x4, fixed_abs, tag = 'smem constant byte address 0x4 - core index']
  #allocation1 [shape = 'u32[144,128]{1,0:T(1,128)}', space=vmem, size = 0x12000, scoped, tag = 'internal scratch']
  %s0 = inlined_call_operand.vmem [shape: f32[16,784], index: 0, kind: input, shape index: {}]
  %s1 = inlined_call_operand.vmem [shape: bf16[784,512], index: 1, kind: input, shape index: {}]
  %s2 = inlined_call_operand.vmem [shape: f32[1,512], index: 2, kind: input, shape index: {}]
  %s3 = inlined_call_operand.hbm [shape: bf16[512,128], index: 3, kind: input, shape index: {}]
  %s4 = inlined_call_operand.vmem [shape: f32[1,128], index: 4, kind: input, shape index: {}]
  %s5 = inlined_call_operand.hbm [shape: f32[16,10], index: 5, kind: output, shape index: {}]
  %s6 = sld [smem:[#allocation0]]
  $region34: #{netfull_forward.1} parent=0
    _
  %s8 = ssub.s32 1, %s6
  %s9 = scalar_select 0, %s8, %s6
  $region1: #{netfull_forward.1} parent=0
    #allocation2 [shape = 'u8[131072]{0}', space=vmem, size = 0x20000, scoped, tag = 'input window, operand 3, single buffered']
    #allocation3 [shape = 's32[1]{0}', space=sflag, size = 0x4, scoped, tag = 'scoped memory for netfull_forward.1']
    #allocation4 [shape = 's32[1]{0}', space=sflag, size = 0x4, scoped, tag = 'scoped memory for netfull_forward.1']
    #allocation5 [shape = 'u8[8192]{0}', space=vmem, size = 0x2000, scoped, tag = 'output window, operand 0, single buffered']
    %10 = vsyncpa [#allocation3], 0
    %11 = vsyncpa [#allocation4], 0
    // Predicated region
    $region2: #{netfull_forward.1} parent=1 // pred_check
      _
    $region3: #{netfull_forward.1} parent=1 // pred_check_branch
      %13 = sbr.rel (0) target = $region5
    $region4: #{netfull_forward.1} parent=1 // pred_region
      _
    $region5: #{netfull_forward.1} parent=1 // pred_fallthru
      _
    // Predicated region
    $region6: #{netfull_forward.1} parent=1 // pred_check
      _
    $region7: #{netfull_forward.1} parent=1 // pred_check_branch
      %15 = sbr.rel (0) target = $region9
    $region8: #{netfull_forward.1} parent=1 // pred_region
      _
    $region9: #{netfull_forward.1} parent=1 // pred_fallthru
      _
    // Predicated region
    $region10: #{netfull_forward.1} parent=1 // pred_check
      _
    $region11: #{netfull_forward.1} parent=1 // pred_check_branch
      %17 = sbr.rel (0) target = $region13
    $region12: #{netfull_forward.1} parent=1 // pred_region
      _
    $region13: #{netfull_forward.1} parent=1 // pred_fallthru
      _
    // Predicated region
    $region14: #{netfull_forward.1} parent=1 // pred_check
      _
    $region15: #{netfull_forward.1} parent=1 // pred_check_branch
      %19 = sbr.rel (0) target = $region17
    $region16: #{netfull_forward.1} parent=1 // pred_region
      %s21 = ssub.s32 4096, 4096
      %22 = vsyncadd [#allocation3], %s21
      %s23 = sshll.u32 [#allocation2], 4
      %s24 = int_to_ptr.vmem [resolvable:$true] %s23
      %29 = dma.hbm_to_vmem [thread:$0]  %s3, 4096, %s24, [#allocation3], 64, 64, 4
    $region17: #{netfull_forward.1} parent=1 // pred_fallthru
      _
    // Predicated region
    $region18: #{netfull_forward.1} parent=1 // pred_check
      _
    $region19: #{netfull_forward.1} parent=1 // pred_check_branch
      %31 = sbr.rel (0) target = $region21
    $region20: #{netfull_forward.1} parent=1 // pred_region
      _
    $region21: #{netfull_forward.1} parent=1 // pred_fallthru
      _
    // Predicated region
    $region22: #{netfull_forward.1} parent=1 // pred_check
      _
    $region23: #{netfull_forward.1} parent=1 // pred_check_branch
      %33 = sbr.rel (0) target = $region25
    $region24: #{netfull_forward.1} parent=1 // pred_region
      %34 = dma.done [#allocation3], 4096
    $region25: #{netfull_forward.1} parent=1 // pred_fallthru
      _
    %v36 = vld [vmem:[%s0] sm:$0xff]
    %v37 = vld [vmem:[%s0 + $0x8] sm:$0xff]
    %v38 = vld [vmem:[%s0 + $0x10] sm:$0xff]
    %v39 = vld [vmem:[%s0 + $0x18] sm:$0xff]
    %v40 = vld [vmem:[%s0 + $0x20] sm:$0xff]
    %v41 = vld [vmem:[%s0 + $0x28] sm:$0xff]
    %v42 = vld [vmem:[%s0 + $0x30] sm:$0xff]
    %v43 = vld [vmem:[%s0 + $0x38] sm:$0xff]
    %v44 = vld [vmem:[%s0 + $0x40] sm:$0xff]
    %v45 = vld [vmem:[%s0 + $0x48] sm:$0xff]
    %v46 = vld [vmem:[%s0 + $0x50] sm:$0xff]
    %v47 = vld [vmem:[%s0 + $0x58] sm:$0xff]
    %v48 = vld [vmem:[%s0 + $0x60] sm:$0xff]
    %v49 = vld [vmem:[%s0 + $0x68] sm:$0xff]
    %v50 = vpack.c.bf16 %v43, %v36
    %v51 = vpack.c.bf16 %v44, %v37
    %v52 = vpack.c.bf16 %v45, %v38
    %v53 = vpack.c.bf16 %v46, %v39
    %v54 = vpack.c.bf16 %v47, %v40
    %v55 = vpack.c.bf16 %v48, %v41
    %v56 = vpack.c.bf16 %v49, %v42
    %v57 = vld [vmem:[%s1] sm:$0xff]
    %v58 = vld [vmem:[%s1 + $0x8] sm:$0xff]
    %v59 = vld [vmem:[%s1 + $0x10] sm:$0xff]
    %v60 = vld [vmem:[%s1 + $0x18] sm:$0xff]
    %v61 = vld [vmem:[%s1 + $0x20] sm:$0xff]
    %v62 = vld [vmem:[%s1 + $0x28] sm:$0xff]
    %v63 = vld [vmem:[%s1 + $0x30] sm:$0xff]
    %v64 = vld [vmem:[%s1 + $0x38] sm:$0xff]
    %v65 = vld [vmem:[%s1 + $0x40] sm:$0xff]
    %v66 = vld [vmem:[%s1 + $0x48] sm:$0xff]
    %v67 = vld [vmem:[%s1 + $0x50] sm:$0xff]
    %v68 = vld [vmem:[%s1 + $0x58] sm:$0xff]
    %v69 = vld [vmem:[%s1 + $0x60] sm:$0xff]
    %v70 = vld [vmem:[%s1 + $0x68] sm:$0xff]
    %v71 = vld [vmem:[%s1 + $0x70] sm:$0xff]
    %v72 = vld [vmem:[%s1 + $0x78] sm:$0xff]
    %v73 = vld [vmem:[%s1 + $0x80] sm:$0xff]
    %v74 = vld [vmem:[%s1 + $0x88] sm:$0xff]
    %v75 = vld [vmem:[%s1 + $0x90] sm:$0xff]
    %v76 = vld [vmem:[%s1 + $0x98] sm:$0xff]
    %v77 = vld [vmem:[%s1 + $0xa0] sm:$0xff]
    %v78 = vld [vmem:[%s1 + $0xa8] sm:$0xff]
    %v79 = vld [vmem:[%s1 + $0xb0] sm:$0xff]
    %v80 = vld [vmem:[%s1 + $0xb8] sm:$0xff]
    %v81 = vld [vmem:[%s1 + $0xc0] sm:$0xff]
    %v82 = vld [vmem:[%s1 + $0xc8] sm:$0xff]
    %v83 = vld [vmem:[%s1 + $0xd0] sm:$0xff]
    %v84 = vld [vmem:[%s1 + $0xd8] sm:$0xff]
    %v85 = vld [vmem:[%s1 + $0xe0] sm:$0xff]
    %v86 = vld [vmem:[%s1 + $0xe8] sm:$0xff]
    %v87 = vld [vmem:[%s1 + $0xf0] sm:$0xff]
    %v88 = vld [vmem:[%s1 + $0xf8] sm:$0xff]
    %v89 = vld [vmem:[%s1 + $0x100] sm:$0xff]
    %v90 = vld [vmem:[%s1 + $0x108] sm:$0xff]
    %v91 = vld [vmem:[%s1 + $0x110] sm:$0xff]
    %v92 = vld [vmem:[%s1 + $0x118] sm:$0xff]
    %v93 = vld [vmem:[%s1 + $0x120] sm:$0xff]
    %v94 = vld [vmem:[%s1 + $0x128] sm:$0xff]
    %v95 = vld [vmem:[%s1 + $0x130] sm:$0xff]
    %v96 = vld [vmem:[%s1 + $0x138] sm:$0xff]
    %v97 = vld [vmem:[%s1 + $0x140] sm:$0xff]
    %v98 = vld [vmem:[%s1 + $0x148] sm:$0xff]
    %v99 = vld [vmem:[%s1 + $0x150] sm:$0xff]
    %v100 = vld [vmem:[%s1 + $0x158] sm:$0xff]
    %v101 = vld [vmem:[%s1 + $0x160] sm:$0xff]
    %v102 = vld [vmem:[%s1 + $0x168] sm:$0xff]
    %v103 = vld [vmem:[%s1 + $0x170] sm:$0xff]
    %v104 = vld [vmem:[%s1 + $0x178] sm:$0xff]
    %v105 = vld [vmem:[%s1 + $0x180] sm:$0xff]
    %v106 = vld [vmem:[%s1 + $0x188] sm:$0xff]
    %v107 = vld [vmem:[%s1 + $0x190] sm:$0xff]
    %v108 = vld [vmem:[%s1 + $0x198] sm:$0xff]
    %v109 = vld [vmem:[%s1 + $0x1a0] sm:$0xff]
    %v110 = vld [vmem:[%s1 + $0x1a8] sm:$0xff]
    %v111 = vld [vmem:[%s1 + $0x1b0] sm:$0xff]
    %v112 = vld [vmem:[%s1 + $0x1b8] sm:$0xff]
    %v113 = vld [vmem:[%s1 + $0x1c0] sm:$0xff]
    %v114 = vld [vmem:[%s1 + $0x1c8] sm:$0xff]
    %v115 = vld [vmem:[%s1 + $0x1d0] sm:$0xff]
    %v116 = vld [vmem:[%s1 + $0x1d8] sm:$0xff]
    %v117 = vld [vmem:[%s1 + $0x1e0] sm:$0xff]
    %v118 = vld [vmem:[%s1 + $0x1e8] sm:$0xff]
    %v119 = vld [vmem:[%s1 + $0x1f0] sm:$0xff]
    %v120 = vld [vmem:[%s1 + $0x1f8] sm:$0xff]
    %v121 = vld [vmem:[%s1 + $0x200] sm:$0xff]
    %v122 = vld [vmem:[%s1 + $0x208] sm:$0xff]
    %v123 = vld [vmem:[%s1 + $0x210] sm:$0xff]
    %v124 = vld [vmem:[%s1 + $0x218] sm:$0xff]
    %v125 = vld [vmem:[%s1 + $0x220] sm:$0xff]
    %v126 = vld [vmem:[%s1 + $0x228] sm:$0xff]
    %v127 = vld [vmem:[%s1 + $0x230] sm:$0xff]
    %v128 = vld [vmem:[%s1 + $0x238] sm:$0xff]
    %v129 = vld [vmem:[%s1 + $0x240] sm:$0xff]
    %v130 = vld [vmem:[%s1 + $0x248] sm:$0xff]
    %v131 = vld [vmem:[%s1 + $0x250] sm:$0xff]
    %v132 = vld [vmem:[%s1 + $0x258] sm:$0xff]
    %v133 = vld [vmem:[%s1 + $0x260] sm:$0xff]
    %v134 = vld [vmem:[%s1 + $0x268] sm:$0xff]
    %v135 = vld [vmem:[%s1 + $0x270] sm:$0xff]
    %v136 = vld [vmem:[%s1 + $0x278] sm:$0xff]
    %v137 = vld [vmem:[%s1 + $0x280] sm:$0xff]
    %v138 = vld [vmem:[%s1 + $0x288] sm:$0xff]
    %v139 = vld [vmem:[%s1 + $0x290] sm:$0xff]
    %v140 = vld [vmem:[%s1 + $0x298] sm:$0xff]
    %v141 = vld [vmem:[%s1 + $0x2a0] sm:$0xff]
    %v142 = vld [vmem:[%s1 + $0x2a8] sm:$0xff]
    %v143 = vld [vmem:[%s1 + $0x2b0] sm:$0xff]
    %v144 = vld [vmem:[%s1 + $0x2b8] sm:$0xff]
    %v145 = vld [vmem:[%s1 + $0x2c0] sm:$0xff]
    %v146 = vld [vmem:[%s1 + $0x2c8] sm:$0xff]
    %v147 = vld [vmem:[%s1 + $0x2d0] sm:$0xff]
    %v148 = vld [vmem:[%s1 + $0x2d8] sm:$0xff]
    %v149 = vld [vmem:[%s1 + $0x2e0] sm:$0xff]
    %v150 = vld [vmem:[%s1 + $0x2e8] sm:$0xff]
    %v151 = vld [vmem:[%s1 + $0x2f0] sm:$0xff]
    %v152 = vld [vmem:[%s1 + $0x2f8] sm:$0xff]
    %v153 = vld [vmem:[%s1 + $0x300] sm:$0xff]
    %v154 = vld [vmem:[%s1 + $0x308] sm:$0xff]
    %v155 = vld [vmem:[%s1 + $0x310] sm:$0xff]
    %v156 = vld [vmem:[%s1 + $0x318] sm:$0xff]
    %v157 = vld [vmem:[%s1 + $0x320] sm:$0xff]
    %v158 = vld [vmem:[%s1 + $0x328] sm:$0xff]
    %v159 = vld [vmem:[%s1 + $0x330] sm:$0xff]
    %v160 = vld [vmem:[%s1 + $0x338] sm:$0xff]
    %v161 = vld [vmem:[%s1 + $0x340] sm:$0xff]
    %v162 = vld [vmem:[%s1 + $0x348] sm:$0xff]
    %v163 = vld [vmem:[%s1 + $0x350] sm:$0xff]
    %v164 = vld [vmem:[%s1 + $0x358] sm:$0xff]
    %v165 = vld [vmem:[%s1 + $0x360] sm:$0xff]
    %v166 = vld [vmem:[%s1 + $0x368] sm:$0xff]
    %v167 = vld [vmem:[%s1 + $0x370] sm:$0xff]
    %v168 = vld [vmem:[%s1 + $0x378] sm:$0xff]
    %v169 = vld [vmem:[%s1 + $0x380] sm:$0xff]
    %v170 = vld [vmem:[%s1 + $0x388] sm:$0xff]
    %v171 = vld [vmem:[%s1 + $0x390] sm:$0xff]
    %v172 = vld [vmem:[%s1 + $0x398] sm:$0xff]
    %v173 = vld [vmem:[%s1 + $0x3a0] sm:$0xff]
    %v174 = vld [vmem:[%s1 + $0x3a8] sm:$0xff]
    %v175 = vld [vmem:[%s1 + $0x3b0] sm:$0xff]
    %v176 = vld [vmem:[%s1 + $0x3b8] sm:$0xff]
    %v177 = vld [vmem:[%s1 + $0x3c0] sm:$0xff]
    %v178 = vld [vmem:[%s1 + $0x3c8] sm:$0xff]
    %v179 = vld [vmem:[%s1 + $0x3d0] sm:$0xff]
    %v180 = vld [vmem:[%s1 + $0x3d8] sm:$0xff]
    %v181 = vld [vmem:[%s1 + $0x3e0] sm:$0xff]
    %v182 = vld [vmem:[%s1 + $0x3e8] sm:$0xff]
    %v183 = vld [vmem:[%s1 + $0x3f0] sm:$0xff]
    %v184 = vld [vmem:[%s1 + $0x3f8] sm:$0xff]
    %v185 = vld [vmem:[%s1 + $0x400] sm:$0xff]
    %v186 = vld [vmem:[%s1 + $0x408] sm:$0xff]
    %v187 = vld [vmem:[%s1 + $0x410] sm:$0xff]
    %v188 = vld [vmem:[%s1 + $0x418] sm:$0xff]
    %v189 = vld [vmem:[%s1 + $0x420] sm:$0xff]
    %v190 = vld [vmem:[%s1 + $0x428] sm:$0xff]
    %v191 = vld [vmem:[%s1 + $0x430] sm:$0xff]
    %v192 = vld [vmem:[%s1 + $0x438] sm:$0xff]
    %v193 = vld [vmem:[%s1 + $0x440] sm:$0xff]
    %v194 = vld [vmem:[%s1 + $0x448] sm:$0xff]
    %v195 = vld [vmem:[%s1 + $0x450] sm:$0xff]
    %v196 = vld [vmem:[%s1 + $0x458] sm:$0xff]
    %v197 = vld [vmem:[%s1 + $0x460] sm:$0xff]
    %v198 = vld [vmem:[%s1 + $0x468] sm:$0xff]
    %v199 = vld [vmem:[%s1 + $0x470] sm:$0xff]
    %v200 = vld [vmem:[%s1 + $0x478] sm:$0xff]
    %v201 = vld [vmem:[%s1 + $0x480] sm:$0xff]
    %v202 = vld [vmem:[%s1 + $0x488] sm:$0xff]
    %v203 = vld [vmem:[%s1 + $0x490] sm:$0xff]
    %v204 = vld [vmem:[%s1 + $0x498] sm:$0xff]
    %v205 = vld [vmem:[%s1 + $0x4a0] sm:$0xff]
    %v206 = vld [vmem:[%s1 + $0x4a8] sm:$0xff]
    %v207 = vld [vmem:[%s1 + $0x4b0] sm:$0xff]
    %v208 = vld [vmem:[%s1 + $0x4b8] sm:$0xff]
    %v209 = vld [vmem:[%s1 + $0x4c0] sm:$0xff]
    %v210 = vld [vmem:[%s1 + $0x4c8] sm:$0xff]
    %v211 = vld [vmem:[%s1 + $0x4d0] sm:$0xff]
    %v212 = vld [vmem:[%s1 + $0x4d8] sm:$0xff]
    %v213 = vld [vmem:[%s1 + $0x4e0] sm:$0xff]
    %v214 = vld [vmem:[%s1 + $0x4e8] sm:$0xff]
    %v215 = vld [vmem:[%s1 + $0x4f0] sm:$0xff]
    %v216 = vld [vmem:[%s1 + $0x4f8] sm:$0xff]
    %v217 = vld [vmem:[%s1 + $0x500] sm:$0xff]
    %v218 = vld [vmem:[%s1 + $0x508] sm:$0xff]
    %v219 = vld [vmem:[%s1 + $0x510] sm:$0xff]
    %v220 = vld [vmem:[%s1 + $0x518] sm:$0xff]
    %v221 = vld [vmem:[%s1 + $0x520] sm:$0xff]
    %v222 = vld [vmem:[%s1 + $0x528] sm:$0xff]
    %v223 = vld [vmem:[%s1 + $0x530] sm:$0xff]
    %v224 = vld [vmem:[%s1 + $0x538] sm:$0xff]
    %v225 = vld [vmem:[%s1 + $0x540] sm:$0xff]
    %v226 = vld [vmem:[%s1 + $0x548] sm:$0xff]
    %v227 = vld [vmem:[%s1 + $0x550] sm:$0xff]
    %v228 = vld [vmem:[%s1 + $0x558] sm:$0xff]
    %v229 = vld [vmem:[%s1 + $0x560] sm:$0xff]
    %v230 = vld [vmem:[%s1 + $0x568] sm:$0xff]
    %v231 = vld [vmem:[%s1 + $0x570] sm:$0xff]
    %v232 = vld [vmem:[%s1 + $0x578] sm:$0xff]
    %v233 = vld [vmem:[%s1 + $0x580] sm:$0xff]
    %v234 = vld [vmem:[%s1 + $0x588] sm:$0xff]
    %v235 = vld [vmem:[%s1 + $0x590] sm:$0xff]
    %v236 = vld [vmem:[%s1 + $0x598] sm:$0xff]
    %v237 = vld [vmem:[%s1 + $0x5a0] sm:$0xff]
    %v238 = vld [vmem:[%s1 + $0x5a8] sm:$0xff]
    %v239 = vld [vmem:[%s1 + $0x5b0] sm:$0xff]
    %v240 = vld [vmem:[%s1 + $0x5b8] sm:$0xff]
    %v241 = vld [vmem:[%s1 + $0x5c0] sm:$0xff]
    %v242 = vld [vmem:[%s1 + $0x5c8] sm:$0xff]
    %v243 = vld [vmem:[%s1 + $0x5d0] sm:$0xff]
    %v244 = vld [vmem:[%s1 + $0x5d8] sm:$0xff]
    %v245 = vld [vmem:[%s1 + $0x5e0] sm:$0xff]
    %v246 = vld [vmem:[%s1 + $0x5e8] sm:$0xff]
    %v247 = vld [vmem:[%s1 + $0x5f0] sm:$0xff]
    %v248 = vld [vmem:[%s1 + $0x5f8] sm:$0xff]
    %v249 = vld [vmem:[%s1 + $0x600] sm:$0xff]
    %v250 = vld [vmem:[%s1 + $0x608] sm:$0xff]
    %v251 = vld [vmem:[%s1 + $0x610] sm:$0xff]
    %v252 = vld [vmem:[%s1 + $0x618] sm:$0xff]
    %v253 = vld [vmem:[%s2] sm:$0xf]
    %v255 = vlaneseq
    %v256 = vshrl.u32 %v255, 7
    %v257 = vsub.s32 0, %v256
    %v258 = vrot.slane %v253, %v257
    %v259 = vlaneseq
    %v260 = vshrl.u32 %v259, 7
    %v261 = vsub.s32 1, %v260
    %v262 = vrot.slane %v253, %v261
    %v263 = vlaneseq
    %v264 = vshrl.u32 %v263, 7
    %v265 = vsub.s32 2, %v264
    %v266 = vrot.slane %v253, %v265
    %v267 = vlaneseq
    %v268 = vshrl.u32 %v267, 7
    %v269 = vsub.s32 3, %v268
    %v270 = vrot.slane %v253, %v269
    %v471 = vunpack.c.l.b16 %v57
    %v472 = vunpack.c.h.b16 %v57
    %v473 = vunpack.c.l.b16 %v58
    %v474 = vunpack.c.h.b16 %v58
    %v475 = vunpack.c.l.b16 %v59
    %v476 = vunpack.c.h.b16 %v59
    %v477 = vunpack.c.l.b16 %v60
    %v478 = vunpack.c.h.b16 %v60
    %v479 = vunpack.c.l.b16 %v61
    %v480 = vunpack.c.h.b16 %v61
    %v481 = vunpack.c.l.b16 %v62
    %v482 = vunpack.c.h.b16 %v62
    %v483 = vunpack.c.l.b16 %v63
    %v484 = vunpack.c.h.b16 %v63
    %v485 = vunpack.c.l.b16 %v64
    %v486 = vunpack.c.h.b16 %v64
    %v487 = vunpack.c.l.b16 %v65
    %v488 = vunpack.c.h.b16 %v65
    %v489 = vunpack.c.l.b16 %v66
    %v490 = vunpack.c.h.b16 %v66
    %v491 = vunpack.c.l.b16 %v67
    %v492 = vunpack.c.h.b16 %v67
    %v493 = vunpack.c.l.b16 %v68
    %v494 = vunpack.c.h.b16 %v68
    %v495 = vunpack.c.l.b16 %v69
    %v496 = vunpack.c.h.b16 %v69
    %v497 = vunpack.c.l.b16 %v70
    %v498 = vunpack.c.h.b16 %v70
    %v499 = vunpack.c.l.b16 %v71
    %v500 = vunpack.c.h.b16 %v71
    %v501 = vunpack.c.l.b16 %v72
    %v502 = vunpack.c.h.b16 %v72
    %v503 = vunpack.c.l.b16 %v73
    %v504 = vunpack.c.h.b16 %v73
    %v505 = vunpack.c.l.b16 %v74
    %v506 = vunpack.c.h.b16 %v74
    %v507 = vunpack.c.l.b16 %v75
    %v508 = vunpack.c.h.b16 %v75
    %v509 = vunpack.c.l.b16 %v76
    %v510 = vunpack.c.h.b16 %v76
    %v511 = vunpack.c.l.b16 %v77
    %v512 = vunpack.c.h.b16 %v77
    %v513 = vunpack.c.l.b16 %v78
    %v514 = vunpack.c.h.b16 %v78
    %v515 = vunpack.c.l.b16 %v79
    %v516 = vunpack.c.h.b16 %v79
    %v517 = vunpack.c.l.b16 %v80
    %v518 = vunpack.c.h.b16 %v80
    %v519 = vunpack.c.l.b16 %v81
    %v520 = vunpack.c.h.b16 %v81
    %v521 = vunpack.c.l.b16 %v82
    %v522 = vunpack.c.h.b16 %v82
    %v523 = vunpack.c.l.b16 %v83
    %v524 = vunpack.c.h.b16 %v83
    %v525 = vunpack.c.l.b16 %v84
    %v526 = vunpack.c.h.b16 %v84
    %v527 = vunpack.c.l.b16 %v85
    %v528 = vunpack.c.h.b16 %v85
    %v529 = vunpack.c.l.b16 %v86
    %v530 = vunpack.c.h.b16 %v86
    %v531 = vunpack.c.l.b16 %v87
    %v532 = vunpack.c.h.b16 %v87
    %v533 = vunpack.c.l.b16 %v88
    %v534 = vunpack.c.h.b16 %v88
    %v535 = vunpack.c.l.b16 %v89
    %v536 = vunpack.c.h.b16 %v89
    %v537 = vunpack.c.l.b16 %v90
    %v538 = vunpack.c.h.b16 %v90
    %v539 = vunpack.c.l.b16 %v91
    %v540 = vunpack.c.h.b16 %v91
    %v541 = vunpack.c.l.b16 %v92
    %v542 = vunpack.c.h.b16 %v92
    %v543 = vunpack.c.l.b16 %v93
    %v544 = vunpack.c.h.b16 %v93
    %v545 = vunpack.c.l.b16 %v94
    %v546 = vunpack.c.h.b16 %v94
    %v547 = vunpack.c.l.b16 %v95
    %v548 = vunpack.c.h.b16 %v95
    %v549 = vunpack.c.l.b16 %v96
    %v550 = vunpack.c.h.b16 %v96
    %v551 = vunpack.c.l.b16 %v97
    %v552 = vunpack.c.h.b16 %v97
    %v553 = vunpack.c.l.b16 %v98
    %v554 = vunpack.c.h.b16 %v98
    %v555 = vunpack.c.l.b16 %v99
    %v556 = vunpack.c.h.b16 %v99
    %v557 = vunpack.c.l.b16 %v100
    %v558 = vunpack.c.h.b16 %v100
    %v559 = vunpack.c.l.b16 %v101
    %v560 = vunpack.c.h.b16 %v101
    %v561 = vunpack.c.l.b16 %v102
    %v562 = vunpack.c.h.b16 %v102
    %v563 = vunpack.c.l.b16 %v103
    %v564 = vunpack.c.h.b16 %v103
    %v565 = vunpack.c.l.b16 %v104
    %v566 = vunpack.c.h.b16 %v104
    %v567 = vunpack.c.l.b16 %v105
    %v568 = vunpack.c.h.b16 %v105
    %v569 = vunpack.c.l.b16 %v106
    %v570 = vunpack.c.h.b16 %v106
    %v571 = vunpack.c.l.b16 %v107
    %v572 = vunpack.c.h.b16 %v107
    %v573 = vunpack.c.l.b16 %v108
    %v574 = vunpack.c.h.b16 %v108
    %v575 = vunpack.c.l.b16 %v109
    %v576 = vunpack.c.h.b16 %v109
    %v577 = vunpack.c.l.b16 %v110
    %v578 = vunpack.c.h.b16 %v110
    %v579 = vunpack.c.l.b16 %v111
    %v580 = vunpack.c.h.b16 %v111
    %v581 = vunpack.c.l.b16 %v112
    %v582 = vunpack.c.h.b16 %v112
    %v583 = vunpack.c.l.b16 %v113
    %v584 = vunpack.c.h.b16 %v113
    %v585 = vunpack.c.l.b16 %v114
    %v586 = vunpack.c.h.b16 %v114
    %v587 = vunpack.c.l.b16 %v115
    %v588 = vunpack.c.h.b16 %v115
    %v589 = vunpack.c.l.b16 %v116
    %v590 = vunpack.c.h.b16 %v116
    %v591 = vunpack.c.l.b16 %v117
    %v592 = vunpack.c.h.b16 %v117
    %v593 = vunpack.c.l.b16 %v118
    %v594 = vunpack.c.h.b16 %v118
    %v595 = vunpack.c.l.b16 %v119
    %v596 = vunpack.c.h.b16 %v119
    %v597 = vunpack.c.l.b16 %v120
    %v598 = vunpack.c.h.b16 %v120
    %v599 = vunpack.c.l.b16 %v121
    %v600 = vunpack.c.h.b16 %v121
    %v601 = vunpack.c.l.b16 %v122
    %v602 = vunpack.c.h.b16 %v122
    %v603 = vunpack.c.l.b16 %v123
    %v604 = vunpack.c.h.b16 %v123
    %v605 = vunpack.c.l.b16 %v124
    %v606 = vunpack.c.h.b16 %v124
    %v607 = vunpack.c.l.b16 %v125
    %v608 = vunpack.c.h.b16 %v125
    %v609 = vunpack.c.l.b16 %v126
    %v610 = vunpack.c.h.b16 %v126
    %v611 = vunpack.c.l.b16 %v127
    %v612 = vunpack.c.h.b16 %v127
    %v613 = vunpack.c.l.b16 %v128
    %v614 = vunpack.c.h.b16 %v128
    %v615 = vunpack.c.l.b16 %v129
    %v616 = vunpack.c.h.b16 %v129
    %v617 = vunpack.c.l.b16 %v130
    %v618 = vunpack.c.h.b16 %v130
    %v619 = vunpack.c.l.b16 %v131
    %v620 = vunpack.c.h.b16 %v131
    %v621 = vunpack.c.l.b16 %v132
    %v622 = vunpack.c.h.b16 %v132
    %v623 = vunpack.c.l.b16 %v133
    %v624 = vunpack.c.h.b16 %v133
    %v625 = vunpack.c.l.b16 %v134
    %v626 = vunpack.c.h.b16 %v134
    %v627 = vunpack.c.l.b16 %v135
    %v628 = vunpack.c.h.b16 %v135
    %v629 = vunpack.c.l.b16 %v136
    %v630 = vunpack.c.h.b16 %v136
    %v631 = vunpack.c.l.b16 %v137
    %v632 = vunpack.c.h.b16 %v137
    %v633 = vunpack.c.l.b16 %v138
    %v634 = vunpack.c.h.b16 %v138
    %v635 = vunpack.c.l.b16 %v139
    %v636 = vunpack.c.h.b16 %v139
    %v637 = vunpack.c.l.b16 %v140
    %v638 = vunpack.c.h.b16 %v140
    %v639 = vunpack.c.l.b16 %v141
    %v640 = vunpack.c.h.b16 %v141
    %v641 = vunpack.c.l.b16 %v142
    %v642 = vunpack.c.h.b16 %v142
    %v643 = vunpack.c.l.b16 %v143
    %v644 = vunpack.c.h.b16 %v143
    %v645 = vunpack.c.l.b16 %v144
    %v646 = vunpack.c.h.b16 %v144
    %v647 = vunpack.c.l.b16 %v145
    %v648 = vunpack.c.h.b16 %v145
    %v649 = vunpack.c.l.b16 %v146
    %v650 = vunpack.c.h.b16 %v146
    %v651 = vunpack.c.l.b16 %v147
    %v652 = vunpack.c.h.b16 %v147
    %v653 = vunpack.c.l.b16 %v148
    %v654 = vunpack.c.h.b16 %v148
    %v655 = vunpack.c.l.b16 %v149
    %v656 = vunpack.c.h.b16 %v149
    %v657 = vunpack.c.l.b16 %v150
    %v658 = vunpack.c.h.b16 %v150
    %v659 = vunpack.c.l.b16 %v151
    %v660 = vunpack.c.h.b16 %v151
    %v661 = vunpack.c.l.b16 %v152
    %v662 = vunpack.c.h.b16 %v152
    %v663 = vunpack.c.l.b16 %v153
    %v664 = vunpack.c.h.b16 %v153
    %v665 = vunpack.c.l.b16 %v154
    %v666 = vunpack.c.h.b16 %v154
    %v667 = vunpack.c.l.b16 %v155
    %v668 = vunpack.c.h.b16 %v155
    %v669 = vunpack.c.l.b16 %v156
    %v670 = vunpack.c.h.b16 %v156
    %v671 = vunpack.c.l.b16 %v157
    %v672 = vunpack.c.h.b16 %v157
    %v673 = vunpack.c.l.b16 %v158
    %v674 = vunpack.c.h.b16 %v158
    %v675 = vunpack.c.l.b16 %v159
    %v676 = vunpack.c.h.b16 %v159
    %v677 = vunpack.c.l.b16 %v160
    %v678 = vunpack.c.h.b16 %v160
    %v679 = vunpack.c.l.b16 %v161
    %v680 = vunpack.c.h.b16 %v161
    %v681 = vunpack.c.l.b16 %v162
    %v682 = vunpack.c.h.b16 %v162
    %v683 = vunpack.c.l.b16 %v163
    %v684 = vunpack.c.h.b16 %v163
    %v685 = vunpack.c.l.b16 %v164
    %v686 = vunpack.c.h.b16 %v164
    %v687 = vunpack.c.l.b16 %v165
    %v688 = vunpack.c.h.b16 %v165
    %v689 = vunpack.c.l.b16 %v166
    %v690 = vunpack.c.h.b16 %v166
    %v691 = vunpack.c.l.b16 %v167
    %v692 = vunpack.c.h.b16 %v167
    %v693 = vunpack.c.l.b16 %v168
    %v694 = vunpack.c.h.b16 %v168
    %v695 = vunpack.c.l.b16 %v169
    %v696 = vunpack.c.h.b16 %v169
    %v697 = vunpack.c.l.b16 %v170
    %v698 = vunpack.c.h.b16 %v170
    %v699 = vunpack.c.l.b16 %v171
    %v700 = vunpack.c.h.b16 %v171
    %v701 = vunpack.c.l.b16 %v172
    %v702 = vunpack.c.h.b16 %v172
    %v703 = vunpack.c.l.b16 %v173
    %v704 = vunpack.c.h.b16 %v173
    %v705 = vunpack.c.l.b16 %v174
    %v706 = vunpack.c.h.b16 %v174
    %v707 = vunpack.c.l.b16 %v175
    %v708 = vunpack.c.h.b16 %v175
    %v709 = vunpack.c.l.b16 %v176
    %v710 = vunpack.c.h.b16 %v176
    %v711 = vunpack.c.l.b16 %v177
    %v712 = vunpack.c.h.b16 %v177
    %v713 = vunpack.c.l.b16 %v178
    %v714 = vunpack.c.h.b16 %v178
    %v715 = vunpack.c.l.b16 %v179
    %v716 = vunpack.c.h.b16 %v179
    %v717 = vunpack.c.l.b16 %v180
    %v718 = vunpack.c.h.b16 %v180
    %v719 = vunpack.c.l.b16 %v181
    %v720 = vunpack.c.h.b16 %v181
    %v721 = vunpack.c.l.b16 %v182
    %v722 = vunpack.c.h.b16 %v182
    %v723 = vunpack.c.l.b16 %v183
    %v724 = vunpack.c.h.b16 %v183
    %v725 = vunpack.c.l.b16 %v184
    %v726 = vunpack.c.h.b16 %v184
    %v727 = vunpack.c.l.b16 %v185
    %v728 = vunpack.c.h.b16 %v185
    %v729 = vunpack.c.l.b16 %v186
    %v730 = vunpack.c.h.b16 %v186
    %v731 = vunpack.c.l.b16 %v187
    %v732 = vunpack.c.h.b16 %v187
    %v733 = vunpack.c.l.b16 %v188
    %v734 = vunpack.c.h.b16 %v188
    %v735 = vunpack.c.l.b16 %v189
    %v736 = vunpack.c.h.b16 %v189
    %v737 = vunpack.c.l.b16 %v190
    %v738 = vunpack.c.h.b16 %v190
    %v739 = vunpack.c.l.b16 %v191
    %v740 = vunpack.c.h.b16 %v191
    %v741 = vunpack.c.l.b16 %v192
    %v742 = vunpack.c.h.b16 %v192
    %v743 = vunpack.c.l.b16 %v193
    %v744 = vunpack.c.h.b16 %v193
    %v745 = vunpack.c.l.b16 %v194
    %v746 = vunpack.c.h.b16 %v194
    %v747 = vunpack.c.l.b16 %v195
    %v748 = vunpack.c.h.b16 %v195
    %v749 = vunpack.c.l.b16 %v196
    %v750 = vunpack.c.h.b16 %v196
    %v751 = vunpack.c.l.b16 %v197
    %v752 = vunpack.c.h.b16 %v197
    %v753 = vunpack.c.l.b16 %v198
    %v754 = vunpack.c.h.b16 %v198
    %v755 = vunpack.c.l.b16 %v199
    %v756 = vunpack.c.h.b16 %v199
    %v757 = vunpack.c.l.b16 %v200
    %v758 = vunpack.c.h.b16 %v200
    %v759 = vunpack.c.l.b16 %v201
    %v760 = vunpack.c.h.b16 %v201
    %v761 = vunpack.c.l.b16 %v202
    %v762 = vunpack.c.h.b16 %v202
    %v763 = vunpack.c.l.b16 %v203
    %v764 = vunpack.c.h.b16 %v203
    %v765 = vunpack.c.l.b16 %v204
    %v766 = vunpack.c.h.b16 %v204
    %v767 = vunpack.c.l.b16 %v205
    %v768 = vunpack.c.h.b16 %v205
    %v769 = vunpack.c.l.b16 %v206
    %v770 = vunpack.c.h.b16 %v206
    %v771 = vunpack.c.l.b16 %v207
    %v772 = vunpack.c.h.b16 %v207
    %v773 = vunpack.c.l.b16 %v208
    %v774 = vunpack.c.h.b16 %v208
    %v775 = vunpack.c.l.b16 %v209
    %v776 = vunpack.c.h.b16 %v209
    %v777 = vunpack.c.l.b16 %v210
    %v778 = vunpack.c.h.b16 %v210
    %v779 = vunpack.c.l.b16 %v211
    %v780 = vunpack.c.h.b16 %v211
    %v781 = vunpack.c.l.b16 %v212
    %v782 = vunpack.c.h.b16 %v212
    %v783 = vunpack.c.l.b16 %v213
    %v784 = vunpack.c.h.b16 %v213
    %v785 = vunpack.c.l.b16 %v214
    %v786 = vunpack.c.h.b16 %v214
    %v787 = vunpack.c.l.b16 %v215
    %v788 = vunpack.c.h.b16 %v215
    %v789 = vunpack.c.l.b16 %v216
    %v790 = vunpack.c.h.b16 %v216
    %v791 = vunpack.c.l.b16 %v217
    %v792 = vunpack.c.h.b16 %v217
    %v793 = vunpack.c.l.b16 %v218
    %v794 = vunpack.c.h.b16 %v218
    %v795 = vunpack.c.l.b16 %v219
    %v796 = vunpack.c.h.b16 %v219
    %v797 = vunpack.c.l.b16 %v220
    %v798 = vunpack.c.h.b16 %v220
    %v799 = vunpack.c.l.b16 %v221
    %v800 = vunpack.c.h.b16 %v221
    %v801 = vunpack.c.l.b16 %v222
    %v802 = vunpack.c.h.b16 %v222
    %v803 = vunpack.c.l.b16 %v223
    %v804 = vunpack.c.h.b16 %v223
    %v805 = vunpack.c.l.b16 %v224
    %v806 = vunpack.c.h.b16 %v224
    %v807 = vunpack.c.l.b16 %v225
    %v808 = vunpack.c.h.b16 %v225
    %v809 = vunpack.c.l.b16 %v226
    %v810 = vunpack.c.h.b16 %v226
    %v811 = vunpack.c.l.b16 %v227
    %v812 = vunpack.c.h.b16 %v227
    %v813 = vunpack.c.l.b16 %v228
    %v814 = vunpack.c.h.b16 %v228
    %v815 = vunpack.c.l.b16 %v229
    %v816 = vunpack.c.h.b16 %v229
    %v817 = vunpack.c.l.b16 %v230
    %v818 = vunpack.c.h.b16 %v230
    %v819 = vunpack.c.l.b16 %v231
    %v820 = vunpack.c.h.b16 %v231
    %v821 = vunpack.c.l.b16 %v232
    %v822 = vunpack.c.h.b16 %v232
    %v823 = vunpack.c.l.b16 %v233
    %v824 = vunpack.c.h.b16 %v233
    %v825 = vunpack.c.l.b16 %v234
    %v826 = vunpack.c.h.b16 %v234
    %v827 = vunpack.c.l.b16 %v235
    %v828 = vunpack.c.h.b16 %v235
    %v829 = vunpack.c.l.b16 %v236
    %v830 = vunpack.c.h.b16 %v236
    %v831 = vunpack.c.l.b16 %v237
    %v832 = vunpack.c.h.b16 %v237
    %v833 = vunpack.c.l.b16 %v238
    %v834 = vunpack.c.h.b16 %v238
    %v835 = vunpack.c.l.b16 %v239
    %v836 = vunpack.c.h.b16 %v239
    %v837 = vunpack.c.l.b16 %v240
    %v838 = vunpack.c.h.b16 %v240
    %v839 = vunpack.c.l.b16 %v241
    %v840 = vunpack.c.h.b16 %v241
    %v841 = vunpack.c.l.b16 %v242
    %v842 = vunpack.c.h.b16 %v242
    %v843 = vunpack.c.l.b16 %v243
    %v844 = vunpack.c.h.b16 %v243
    %v845 = vunpack.c.l.b16 %v244
    %v846 = vunpack.c.h.b16 %v244
    %v847 = vunpack.c.l.b16 %v245
    %v848 = vunpack.c.h.b16 %v245
    %v849 = vunpack.c.l.b16 %v246
    %v850 = vunpack.c.h.b16 %v246
    %v851 = vunpack.c.l.b16 %v247
    %v852 = vunpack.c.h.b16 %v247
    %v853 = vunpack.c.l.b16 %v248
    %v854 = vunpack.c.h.b16 %v248
    %v855 = vunpack.c.l.b16 %v249
    %v856 = vunpack.c.h.b16 %v249
    %v857 = vunpack.c.l.b16 %v250
    %v858 = vunpack.c.h.b16 %v250
    %v859 = vunpack.c.l.b16 %v251
    %v860 = vunpack.c.h.b16 %v251
    %v861 = vunpack.c.l.b16 %v252
    %v862 = vunpack.c.h.b16 %v252
    %v863 = vpack.c.b16 %v475, %v471
    %v864 = vpack.c.b16 %v476, %v472
    %v865 = vpack.c.b16 %v477, %v473
    %v866 = vpack.c.b16 %v478, %v474
    %v867 = vpack.c.b16 %v483, %v479
    %v868 = vpack.c.b16 %v484, %v480
    %v869 = vpack.c.b16 %v485, %v481
    %v870 = vpack.c.b16 %v486, %v482
    %v871 = vpack.c.b16 %v491, %v487
    %v872 = vpack.c.b16 %v492, %v488
    %v873 = vpack.c.b16 %v493, %v489
    %v874 = vpack.c.b16 %v494, %v490
    %v875 = vpack.c.b16 %v499, %v495
    %v876 = vpack.c.b16 %v500, %v496
    %v877 = vpack.c.b16 %v501, %v497
    %v878 = vpack.c.b16 %v502, %v498
    %v879 = vpack.c.b16 %v507, %v503
    %v880 = vpack.c.b16 %v508, %v504
    %v881 = vpack.c.b16 %v509, %v505
    %v882 = vpack.c.b16 %v510, %v506
    %v883 = vpack.c.b16 %v515, %v511
    %v884 = vpack.c.b16 %v516, %v512
    %v885 = vpack.c.b16 %v517, %v513
    %v886 = vpack.c.b16 %v518, %v514
    %v887 = vpack.c.b16 %v523, %v519
    %v888 = vpack.c.b16 %v524, %v520
    %v889 = vpack.c.b16 %v525, %v521
    %v890 = vpack.c.b16 %v526, %v522
    %v891 = vpack.c.b16 %v531, %v527
    %v892 = vpack.c.b16 %v532, %v528
    %v893 = vpack.c.b16 %v533, %v529
    %v894 = vpack.c.b16 %v534, %v530
    %v895 = vpack.c.b16 %v539, %v535
    %v896 = vpack.c.b16 %v540, %v536
    %v897 = vpack.c.b16 %v541, %v537
    %v898 = vpack.c.b16 %v542, %v538
    %v899 = vpack.c.b16 %v547, %v543
    %v900 = vpack.c.b16 %v548, %v544
    %v901 = vpack.c.b16 %v549, %v545
    %v902 = vpack.c.b16 %v550, %v546
    %v903 = vpack.c.b16 %v555, %v551
    %v904 = vpack.c.b16 %v556, %v552
    %v905 = vpack.c.b16 %v557, %v553
    %v906 = vpack.c.b16 %v558, %v554
    %v907 = vpack.c.b16 %v563, %v559
    %v908 = vpack.c.b16 %v564, %v560
    %v909 = vpack.c.b16 %v565, %v561
    %v910 = vpack.c.b16 %v566, %v562
    %v911 = vpack.c.b16 %v571, %v567
    %v912 = vpack.c.b16 %v572, %v568
    %v913 = vpack.c.b16 %v573, %v569
    %v914 = vpack.c.b16 %v574, %v570
    %v915 = vpack.c.b16 %v579, %v575
    %v916 = vpack.c.b16 %v580, %v576
    %v917 = vpack.c.b16 %v581, %v577
    %v918 = vpack.c.b16 %v582, %v578
    %v919 = vpack.c.b16 %v587, %v583
    %v920 = vpack.c.b16 %v588, %v584
    %v921 = vpack.c.b16 %v589, %v585
    %v922 = vpack.c.b16 %v590, %v586
    %v923 = vpack.c.b16 %v595, %v591
    %v924 = vpack.c.b16 %v596, %v592
    %v925 = vpack.c.b16 %v597, %v593
    %v926 = vpack.c.b16 %v598, %v594
    %v927 = vpack.c.b16 %v603, %v599
    %v928 = vpack.c.b16 %v604, %v600
    %v929 = vpack.c.b16 %v605, %v601
    %v930 = vpack.c.b16 %v606, %v602
    %v931 = vpack.c.b16 %v611, %v607
    %v932 = vpack.c.b16 %v612, %v608
    %v933 = vpack.c.b16 %v613, %v609
    %v934 = vpack.c.b16 %v614, %v610
    %v935 = vpack.c.b16 %v619, %v615
    %v936 = vpack.c.b16 %v620, %v616
    %v937 = vpack.c.b16 %v621, %v617
    %v938 = vpack.c.b16 %v622, %v618
    %v939 = vpack.c.b16 %v627, %v623
    %v940 = vpack.c.b16 %v628, %v624
    %v941 = vpack.c.b16 %v629, %v625
    %v942 = vpack.c.b16 %v630, %v626
    %v943 = vpack.c.b16 %v635, %v631
    %v944 = vpack.c.b16 %v636, %v632
    %v945 = vpack.c.b16 %v637, %v633
    %v946 = vpack.c.b16 %v638, %v634
    %v947 = vpack.c.b16 %v643, %v639
    %v948 = vpack.c.b16 %v644, %v640
    %v949 = vpack.c.b16 %v645, %v641
    %v950 = vpack.c.b16 %v646, %v642
    %v951 = vpack.c.b16 %v651, %v647
    %v952 = vpack.c.b16 %v652, %v648
    %v953 = vpack.c.b16 %v653, %v649
    %v954 = vpack.c.b16 %v654, %v650
    %v955 = vpack.c.b16 %v659, %v655
    %v956 = vpack.c.b16 %v660, %v656
    %v957 = vpack.c.b16 %v661, %v657
    %v958 = vpack.c.b16 %v662, %v658
    %v959 = vpack.c.b16 %v667, %v663
    %v960 = vpack.c.b16 %v668, %v664
    %v961 = vpack.c.b16 %v669, %v665
    %v962 = vpack.c.b16 %v670, %v666
    %v963 = vpack.c.b16 %v675, %v671
    %v964 = vpack.c.b16 %v676, %v672
    %v965 = vpack.c.b16 %v677, %v673
    %v966 = vpack.c.b16 %v678, %v674
    %v967 = vpack.c.b16 %v683, %v679
    %v968 = vpack.c.b16 %v684, %v680
    %v969 = vpack.c.b16 %v685, %v681
    %v970 = vpack.c.b16 %v686, %v682
    %v971 = vpack.c.b16 %v691, %v687
    %v972 = vpack.c.b16 %v692, %v688
    %v973 = vpack.c.b16 %v693, %v689
    %v974 = vpack.c.b16 %v694, %v690
    %v975 = vpack.c.b16 %v699, %v695
    %v976 = vpack.c.b16 %v700, %v696
    %v977 = vpack.c.b16 %v701, %v697
    %v978 = vpack.c.b16 %v702, %v698
    %v979 = vpack.c.b16 %v707, %v703
    %v980 = vpack.c.b16 %v708, %v704
    %v981 = vpack.c.b16 %v709, %v705
    %v982 = vpack.c.b16 %v710, %v706
    %v983 = vpack.c.b16 %v715, %v711
    %v984 = vpack.c.b16 %v716, %v712
    %v985 = vpack.c.b16 %v717, %v713
    %v986 = vpack.c.b16 %v718, %v714
    %v987 = vpack.c.b16 %v723, %v719
    %v988 = vpack.c.b16 %v724, %v720
    %v989 = vpack.c.b16 %v725, %v721
    %v990 = vpack.c.b16 %v726, %v722
    %v991 = vpack.c.b16 %v731, %v727
    %v992 = vpack.c.b16 %v732, %v728
    %v993 = vpack.c.b16 %v733, %v729
    %v994 = vpack.c.b16 %v734, %v730
    %v995 = vpack.c.b16 %v739, %v735
    %v996 = vpack.c.b16 %v740, %v736
    %v997 = vpack.c.b16 %v741, %v737
    %v998 = vpack.c.b16 %v742, %v738
    %v999 = vpack.c.b16 %v747, %v743
    %v1000 = vpack.c.b16 %v748, %v744
    %v1001 = vpack.c.b16 %v749, %v745
    %v1002 = vpack.c.b16 %v750, %v746
    %v1003 = vpack.c.b16 %v755, %v751
    %v1004 = vpack.c.b16 %v756, %v752
    %v1005 = vpack.c.b16 %v757, %v753
    %v1006 = vpack.c.b16 %v758, %v754
    %v1007 = vpack.c.b16 %v763, %v759
    %v1008 = vpack.c.b16 %v764, %v760
    %v1009 = vpack.c.b16 %v765, %v761
    %v1010 = vpack.c.b16 %v766, %v762
    %v1011 = vpack.c.b16 %v771, %v767
    %v1012 = vpack.c.b16 %v772, %v768
    %v1013 = vpack.c.b16 %v773, %v769
    %v1014 = vpack.c.b16 %v774, %v770
    %v1015 = vpack.c.b16 %v779, %v775
    %v1016 = vpack.c.b16 %v780, %v776
    %v1017 = vpack.c.b16 %v781, %v777
    %v1018 = vpack.c.b16 %v782, %v778
    %v1019 = vpack.c.b16 %v787, %v783
    %v1020 = vpack.c.b16 %v788, %v784
    %v1021 = vpack.c.b16 %v789, %v785
    %v1022 = vpack.c.b16 %v790, %v786
    %v1023 = vpack.c.b16 %v795, %v791
    %v1024 = vpack.c.b16 %v796, %v792
    %v1025 = vpack.c.b16 %v797, %v793
    %v1026 = vpack.c.b16 %v798, %v794
    %v1027 = vpack.c.b16 %v803, %v799
    %v1028 = vpack.c.b16 %v804, %v800
    %v1029 = vpack.c.b16 %v805, %v801
    %v1030 = vpack.c.b16 %v806, %v802
    %v1031 = vpack.c.b16 %v811, %v807
    %v1032 = vpack.c.b16 %v812, %v808
    %v1033 = vpack.c.b16 %v813, %v809
    %v1034 = vpack.c.b16 %v814, %v810
    %v1035 = vpack.c.b16 %v819, %v815
    %v1036 = vpack.c.b16 %v820, %v816
    %v1037 = vpack.c.b16 %v821, %v817
    %v1038 = vpack.c.b16 %v822, %v818
    %v1039 = vpack.c.b16 %v827, %v823
    %v1040 = vpack.c.b16 %v828, %v824
    %v1041 = vpack.c.b16 %v829, %v825
    %v1042 = vpack.c.b16 %v830, %v826
    %v1043 = vpack.c.b16 %v835, %v831
    %v1044 = vpack.c.b16 %v836, %v832
    %v1045 = vpack.c.b16 %v837, %v833
    %v1046 = vpack.c.b16 %v838, %v834
    %v1047 = vpack.c.b16 %v843, %v839
    %v1048 = vpack.c.b16 %v844, %v840
    %v1049 = vpack.c.b16 %v845, %v841
    %v1050 = vpack.c.b16 %v846, %v842
    %v1051 = vpack.c.b16 %v851, %v847
    %v1052 = vpack.c.b16 %v852, %v848
    %v1053 = vpack.c.b16 %v853, %v849
    %v1054 = vpack.c.b16 %v854, %v850
    %v1055 = vpack.c.b16 %v859, %v855
    %v1056 = vpack.c.b16 %v860, %v856
    %v1057 = vpack.c.b16 %v861, %v857
    %v1058 = vpack.c.b16 %v862, %v858
    %vm1255 = vcmask 130048
    %v1257 = vsel %vm1255, %v56, 0
    %1259 = vmatprep.subr.bf16.mxu0 %v864
    %1260 = vmatpush1.bf16.msra.mxu0 %v863
    %1261 = vmatprep.subr.bf16.mxu0 %v868
    %1262 = vmatpush1.bf16.msra.mxu0 %v867
    %1263 = vmatprep.subr.bf16.mxu0 %v872
    %1264 = vmatpush1.bf16.msra.mxu0 %v871
    %1265 = vmatprep.subr.bf16.mxu0 %v876
    %1266 = vmatpush1.bf16.msra.mxu0 %v875
    %1267 = vmatprep.subr.bf16.mxu0 %v880
    %1268 = vmatpush1.bf16.msra.mxu0 %v879
    %1269 = vmatprep.subr.bf16.mxu0 %v884
    %1270 = vmatpush1.bf16.msra.mxu0 %v883
    %1271 = vmatprep.subr.bf16.mxu0 %v888
    %1272 = vmatpush1.bf16.msra.mxu0 %v887
    %1273 = vmatprep.subr.bf16.mxu0 %v892
    %1274 = vmatpush1.bf16.msra.mxu0 %v891
    %1275 = vmatprep.subr.bf16.mxu0 %v896
    %1276 = vmatpush1.bf16.msra.mxu0 %v895
    %1277 = vmatprep.subr.bf16.mxu0 %v900
    %1278 = vmatpush1.bf16.msra.mxu0 %v899
    %1279 = vmatprep.subr.bf16.mxu0 %v904
    %1280 = vmatpush1.bf16.msra.mxu0 %v903
    %1281 = vmatprep.subr.bf16.mxu0 %v908
    %1282 = vmatpush1.bf16.msra.mxu0 %v907
    %1283 = vmatprep.subr.bf16.mxu0 %v912
    %1284 = vmatpush1.bf16.msra.mxu0 %v911
    %1285 = vmatprep.subr.bf16.mxu0 %v916
    %1286 = vmatpush1.bf16.msra.mxu0 %v915
    %1287 = vmatprep.subr.bf16.mxu0 %v920
    %1288 = vmatpush1.bf16.msra.mxu0 %v919
    %1289 = vmatprep.subr.bf16.mxu0 %v924
    %1290 = vmatpush1.bf16.msra.mxu0 %v923
    %1291 = vmatprep.mubr.bf16.mxu0 %v51
    %1292 = vmatmul.mubr.bf16.gmra.mrb[0].mxu0 %v50
    %v1293 = vpop.f32.mrb[0].mxu0
    %v1294 = vadd.f32 %v258, %v1293
    %v1295 = vpop.f32.mrb[0].mxu0
    %v1296 = vadd.f32 %v262, %v1295
    %v1297 = vpop.f32.mrb[0].mxu0
    %v1298 = vadd.f32 %v258, %v1297
    %v1299 = vpop.f32.mrb[0].mxu0
    %v1300 = vadd.f32 %v262, %v1299
    %1301 = vdwg.mxu0
    %1302 = vmatprep.subr.bf16.mxu0 %v928
    %1303 = vmatpush1.bf16.msra.mxu0 %v927
    %1304 = vmatprep.subr.bf16.mxu0 %v932
    %1305 = vmatpush1.bf16.msra.mxu0 %v931
    %1306 = vmatprep.subr.bf16.mxu0 %v936
    %1307 = vmatpush1.bf16.msra.mxu0 %v935
    %1308 = vmatprep.subr.bf16.mxu0 %v940
    %1309 = vmatpush1.bf16.msra.mxu0 %v939
    %1310 = vmatprep.subr.bf16.mxu0 %v944
    %1311 = vmatpush1.bf16.msra.mxu0 %v943
    %1312 = vmatprep.subr.bf16.mxu0 %v948
    %1313 = vmatpush1.bf16.msra.mxu0 %v947
    %1314 = vmatprep.subr.bf16.mxu0 %v952
    %1315 = vmatpush1.bf16.msra.mxu0 %v951
    %1316 = vmatprep.subr.bf16.mxu0 %v956
    %1317 = vmatpush1.bf16.msra.mxu0 %v955
    %1318 = vmatprep.subr.bf16.mxu0 %v960
    %1319 = vmatpush1.bf16.msra.mxu0 %v959
    %1320 = vmatprep.subr.bf16.mxu0 %v964
    %1321 = vmatpush1.bf16.msra.mxu0 %v963
    %1322 = vmatprep.subr.bf16.mxu0 %v968
    %1323 = vmatpush1.bf16.msra.mxu0 %v967
    %1324 = vmatprep.subr.bf16.mxu0 %v972
    %1325 = vmatpush1.bf16.msra.mxu0 %v971
    %1326 = vmatprep.subr.bf16.mxu0 %v976
    %1327 = vmatpush1.bf16.msra.mxu0 %v975
    %1328 = vmatprep.subr.bf16.mxu0 %v980
    %1329 = vmatpush1.bf16.msra.mxu0 %v979
    %1330 = vmatprep.subr.bf16.mxu0 %v984
    %1331 = vmatpush1.bf16.msra.mxu0 %v983
    %1332 = vmatprep.subr.bf16.mxu0 %v988
    %1333 = vmatpush1.bf16.msra.mxu0 %v987
    %1334 = vmatprep.mubr.bf16.mxu0 %v53
    %1335 = vmatmul.mubr.bf16.gmra.mrb[0].mxu0 %v52
    %v1336 = vpop.f32.mrb[0].mxu0
    %v1337 = vadd.f32 %v1294, %v1336
    %v1338 = vpop.f32.mrb[0].mxu0
    %v1339 = vadd.f32 %v1296, %v1338
    %v1340 = vpop.f32.mrb[0].mxu0
    %v1341 = vadd.f32 %v1298, %v1340
    %v1342 = vpop.f32.mrb[0].mxu0
    %v1343 = vadd.f32 %v1300, %v1342
    %1344 = vdwg.mxu0
    %1345 = vmatprep.subr.bf16.mxu0 %v992
    %1346 = vmatpush1.bf16.msra.mxu0 %v991
    %1347 = vmatprep.subr.bf16.mxu0 %v996
    %1348 = vmatpush1.bf16.msra.mxu0 %v995
    %1349 = vmatprep.subr.bf16.mxu0 %v1000
    %1350 = vmatpush1.bf16.msra.mxu0 %v999
    %1351 = vmatprep.subr.bf16.mxu0 %v1004
    %1352 = vmatpush1.bf16.msra.mxu0 %v1003
    %1353 = vmatprep.subr.bf16.mxu0 %v1008
    %1354 = vmatpush1.bf16.msra.mxu0 %v1007
    %1355 = vmatprep.subr.bf16.mxu0 %v1012
    %1356 = vmatpush1.bf16.msra.mxu0 %v1011
    %1357 = vmatprep.subr.bf16.mxu0 %v1016
    %1358 = vmatpush1.bf16.msra.mxu0 %v1015
    %1359 = vmatprep.subr.bf16.mxu0 %v1020
    %1360 = vmatpush1.bf16.msra.mxu0 %v1019
    %1361 = vmatprep.subr.bf16.mxu0 %v1024
    %1362 = vmatpush1.bf16.msra.mxu0 %v1023
    %1363 = vmatprep.subr.bf16.mxu0 %v1028
    %1364 = vmatpush1.bf16.msra.mxu0 %v1027
    %1365 = vmatprep.subr.bf16.mxu0 %v1032
    %1366 = vmatpush1.bf16.msra.mxu0 %v1031
    %1367 = vmatprep.subr.bf16.mxu0 %v1036
    %1368 = vmatpush1.bf16.msra.mxu0 %v1035
    %1369 = vmatprep.subr.bf16.mxu0 %v1040
    %1370 = vmatpush1.bf16.msra.mxu0 %v1039
    %1371 = vmatprep.subr.bf16.mxu0 %v1044
    %1372 = vmatpush1.bf16.msra.mxu0 %v1043
    %1373 = vmatprep.subr.bf16.mxu0 %v1048
    %1374 = vmatpush1.bf16.msra.mxu0 %v1047
    %1375 = vmatprep.subr.bf16.mxu0 %v1052
    %1376 = vmatpush1.bf16.msra.mxu0 %v1051
    %1377 = vmatprep.mubr.bf16.mxu0 %v55
    %1378 = vmatmul.mubr.bf16.gmra.mrb[0].mxu0 %v54
    %v1379 = vpop.f32.mrb[0].mxu0
    %v1380 = vadd.f32 %v1337, %v1379
    %v1381 = vpop.f32.mrb[0].mxu0
    %v1382 = vadd.f32 %v1339, %v1381
    %v1383 = vpop.f32.mrb[0].mxu0
    %v1384 = vadd.f32 %v1341, %v1383
    %v1385 = vpop.f32.mrb[0].mxu0
    %v1386 = vadd.f32 %v1343, %v1385
    %1387 = vdwg.mxu0
    %1388 = vmatprep.subr.bf16.mxu0 %v1056
    %1389 = vmatpush1.bf16.msra.mxu0 %v1055
    %1390 = vmatprep.subr.bf16.mxu0 0
    %1391 = vmatpush1.bf16.msra.mxu0 0
    %1392 = vmatprep.subr.bf16.mxu0 0
    %1393 = vmatpush1.bf16.msra.mxu0 0
    %1394 = vmatprep.subr.bf16.mxu0 0
    %1395 = vmatpush1.bf16.msra.mxu0 0
    %1396 = vmatprep.subr.bf16.mxu0 0
    %1397 = vmatpush1.bf16.msra.mxu0 0
    %1398 = vmatprep.subr.bf16.mxu0 0
    %1399 = vmatpush1.bf16.msra.mxu0 0
    %1400 = vmatprep.subr.bf16.mxu0 0
    %1401 = vmatpush1.bf16.msra.mxu0 0
    %1402 = vmatprep.subr.bf16.mxu0 0
    %1403 = vmatpush1.bf16.msra.mxu0 0
    %1404 = vmatprep.subr.bf16.mxu0 0
    %1405 = vmatpush1.bf16.msra.mxu0 0
    %1406 = vmatprep.subr.bf16.mxu0 0
    %1407 = vmatpush1.bf16.msra.mxu0 0
    %1408 = vmatprep.subr.bf16.mxu0 0
    %1409 = vmatpush1.bf16.msra.mxu0 0
    %1410 = vmatprep.subr.bf16.mxu0 0
    %1411 = vmatpush1.bf16.msra.mxu0 0
    %1412 = vmatprep.subr.bf16.mxu0 0
    %1413 = vmatpush1.bf16.msra.mxu0 0
    %1414 = vmatprep.subr.bf16.mxu0 0
    %1415 = vmatpush1.bf16.msra.mxu0 0
    %1416 = vmatprep.subr.bf16.mxu0 0
    %1417 = vmatpush1.bf16.msra.mxu0 0
    %1418 = vmatprep.subr.bf16.mxu0 0
    %1419 = vmatpush1.bf16.msra.mxu0 0
    %1420 = vmatprep.mubr.bf16.mxu0 0
    %1421 = vmatmul.mubr.bf16.gmra.mrb[0].mxu0 %v1257
    %v1422 = vpop.f32.mrb[0].mxu0
    %v1423 = vadd.f32 %v1380, %v1422
    %v1424 = vpop.f32.mrb[0].mxu0
    %v1425 = vadd.f32 %v1382, %v1424
    %v1426 = vpop.f32.mrb[0].mxu0
    %v1427 = vadd.f32 %v1384, %v1426
    %v1428 = vpop.f32.mrb[0].mxu0
    %v1429 = vadd.f32 %v1386, %v1428
    %1430 = vdwg.mxu0
    %1431 = vmatprep.subr.bf16.mxu0 %v866
    %1432 = vmatpush1.bf16.msra.mxu0 %v865
    %1433 = vmatprep.subr.bf16.mxu0 %v870
    %1434 = vmatpush1.bf16.msra.mxu0 %v869
    %1435 = vmatprep.subr.bf16.mxu0 %v874
    %1436 = vmatpush1.bf16.msra.mxu0 %v873
    %1437 = vmatprep.subr.bf16.mxu0 %v878
    %1438 = vmatpush1.bf16.msra.mxu0 %v877
    %1439 = vmatprep.subr.bf16.mxu0 %v882
    %1440 = vmatpush1.bf16.msra.mxu0 %v881
    %1441 = vmatprep.subr.bf16.mxu0 %v886
    %1442 = vmatpush1.bf16.msra.mxu0 %v885
    %1443 = vmatprep.subr.bf16.mxu0 %v890
    %1444 = vmatpush1.bf16.msra.mxu0 %v889
    %1445 = vmatprep.subr.bf16.mxu0 %v894
    %1446 = vmatpush1.bf16.msra.mxu0 %v893
    %1447 = vmatprep.subr.bf16.mxu0 %v898
    %1448 = vmatpush1.bf16.msra.mxu0 %v897
    %1449 = vmatprep.subr.bf16.mxu0 %v902
    %1450 = vmatpush1.bf16.msra.mxu0 %v901
    %1451 = vmatprep.subr.bf16.mxu0 %v906
    %1452 = vmatpush1.bf16.msra.mxu0 %v905
    %1453 = vmatprep.subr.bf16.mxu0 %v910
    %1454 = vmatpush1.bf16.msra.mxu0 %v909
    %1455 = vmatprep.subr.bf16.mxu0 %v914
    %1456 = vmatpush1.bf16.msra.mxu0 %v913
    %1457 = vmatprep.subr.bf16.mxu0 %v918
    %1458 = vmatpush1.bf16.msra.mxu0 %v917
    %1459 = vmatprep.subr.bf16.mxu0 %v922
    %1460 = vmatpush1.bf16.msra.mxu0 %v921
    %1461 = vmatprep.subr.bf16.mxu0 %v926
    %1462 = vmatpush1.bf16.msra.mxu0 %v925
    %1463 = vmatprep.mubr.bf16.mxu0 %v51
    %1464 = vmatmul.mubr.bf16.gmra.mrb[0].mxu0 %v50
    %v1465 = vpop.f32.mrb[0].mxu0
    %v1466 = vadd.f32 %v266, %v1465
    %v1467 = vpop.f32.mrb[0].mxu0
    %v1468 = vadd.f32 %v270, %v1467
    %v1469 = vpop.f32.mrb[0].mxu0
    %v1470 = vadd.f32 %v266, %v1469
    %v1471 = vpop.f32.mrb[0].mxu0
    %v1472 = vadd.f32 %v270, %v1471
    %1473 = vdwg.mxu0
    %1474 = vmatprep.subr.bf16.mxu0 %v930
    %1475 = vmatpush1.bf16.msra.mxu0 %v929
    %1476 = vmatprep.subr.bf16.mxu0 %v934
    %1477 = vmatpush1.bf16.msra.mxu0 %v933
    %1478 = vmatprep.subr.bf16.mxu0 %v938
    %1479 = vmatpush1.bf16.msra.mxu0 %v937
    %1480 = vmatprep.subr.bf16.mxu0 %v942
    %1481 = vmatpush1.bf16.msra.mxu0 %v941
    %1482 = vmatprep.subr.bf16.mxu0 %v946
    %1483 = vmatpush1.bf16.msra.mxu0 %v945
    %1484 = vmatprep.subr.bf16.mxu0 %v950
    %1485 = vmatpush1.bf16.msra.mxu0 %v949
    %1486 = vmatprep.subr.bf16.mxu0 %v954
    %1487 = vmatpush1.bf16.msra.mxu0 %v953
    %1488 = vmatprep.subr.bf16.mxu0 %v958
    %1489 = vmatpush1.bf16.msra.mxu0 %v957
    %1490 = vmatprep.subr.bf16.mxu0 %v962
    %1491 = vmatpush1.bf16.msra.mxu0 %v961
    %1492 = vmatprep.subr.bf16.mxu0 %v966
    %1493 = vmatpush1.bf16.msra.mxu0 %v965
    %1494 = vmatprep.subr.bf16.mxu0 %v970
    %1495 = vmatpush1.bf16.msra.mxu0 %v969
    %1496 = vmatprep.subr.bf16.mxu0 %v974
    %1497 = vmatpush1.bf16.msra.mxu0 %v973
    %1498 = vmatprep.subr.bf16.mxu0 %v978
    %1499 = vmatpush1.bf16.msra.mxu0 %v977
    %1500 = vmatprep.subr.bf16.mxu0 %v982
    %1501 = vmatpush1.bf16.msra.mxu0 %v981
    %1502 = vmatprep.subr.bf16.mxu0 %v986
    %1503 = vmatpush1.bf16.msra.mxu0 %v985
    %1504 = vmatprep.subr.bf16.mxu0 %v990
    %1505 = vmatpush1.bf16.msra.mxu0 %v989
    %1506 = vmatprep.mubr.bf16.mxu0 %v53
    %1507 = vmatmul.mubr.bf16.gmra.mrb[0].mxu0 %v52
    %v1508 = vpop.f32.mrb[0].mxu0
    %v1509 = vadd.f32 %v1466, %v1508
    %v1510 = vpop.f32.mrb[0].mxu0
    %v1511 = vadd.f32 %v1468, %v1510
    %v1512 = vpop.f32.mrb[0].mxu0
    %v1513 = vadd.f32 %v1470, %v1512
    %v1514 = vpop.f32.mrb[0].mxu0
    %v1515 = vadd.f32 %v1472, %v1514
    %1516 = vdwg.mxu0
    %1517 = vmatprep.subr.bf16.mxu0 %v994
    %1518 = vmatpush1.bf16.msra.mxu0 %v993
    %1519 = vmatprep.subr.bf16.mxu0 %v998
    %1520 = vmatpush1.bf16.msra.mxu0 %v997
    %1521 = vmatprep.subr.bf16.mxu0 %v1002
    %1522 = vmatpush1.bf16.msra.mxu0 %v1001
    %1523 = vmatprep.subr.bf16.mxu0 %v1006
    %1524 = vmatpush1.bf16.msra.mxu0 %v1005
    %1525 = vmatprep.subr.bf16.mxu0 %v1010
    %1526 = vmatpush1.bf16.msra.mxu0 %v1009
    %1527 = vmatprep.subr.bf16.mxu0 %v1014
    %1528 = vmatpush1.bf16.msra.mxu0 %v1013
    %1529 = vmatprep.subr.bf16.mxu0 %v1018
    %1530 = vmatpush1.bf16.msra.mxu0 %v1017
    %1531 = vmatprep.subr.bf16.mxu0 %v1022
    %1532 = vmatpush1.bf16.msra.mxu0 %v1021
    %1533 = vmatprep.subr.bf16.mxu0 %v1026
    %1534 = vmatpush1.bf16.msra.mxu0 %v1025
    %1535 = vmatprep.subr.bf16.mxu0 %v1030
    %1536 = vmatpush1.bf16.msra.mxu0 %v1029
    %1537 = vmatprep.subr.bf16.mxu0 %v1034
    %1538 = vmatpush1.bf16.msra.mxu0 %v1033
    %1539 = vmatprep.subr.bf16.mxu0 %v1038
    %1540 = vmatpush1.bf16.msra.mxu0 %v1037
    %1541 = vmatprep.subr.bf16.mxu0 %v1042
    %1542 = vmatpush1.bf16.msra.mxu0 %v1041
    %1543 = vmatprep.subr.bf16.mxu0 %v1046
    %1544 = vmatpush1.bf16.msra.mxu0 %v1045
    %1545 = vmatprep.subr.bf16.mxu0 %v1050
    %1546 = vmatpush1.bf16.msra.mxu0 %v1049
    %1547 = vmatprep.subr.bf16.mxu0 %v1054
    %1548 = vmatpush1.bf16.msra.mxu0 %v1053
    %1549 = vmatprep.mubr.bf16.mxu0 %v55
    %1550 = vmatmul.mubr.bf16.gmra.mrb[0].mxu0 %v54
    %v1551 = vpop.f32.mrb[0].mxu0
    %v1552 = vadd.f32 %v1509, %v1551
    %v1553 = vpop.f32.mrb[0].mxu0
    %v1554 = vadd.f32 %v1511, %v1553
    %v1555 = vpop.f32.mrb[0].mxu0
    %v1556 = vadd.f32 %v1513, %v1555
    %v1557 = vpop.f32.mrb[0].mxu0
    %v1558 = vadd.f32 %v1515, %v1557
    %1559 = vdwg.mxu0
    %1560 = vmatprep.subr.bf16.mxu0 %v1058
    %1561 = vmatpush1.bf16.msra.mxu0 %v1057
    %1562 = vmatprep.subr.bf16.mxu0 0
    %1563 = vmatpush1.bf16.msra.mxu0 0
    %1564 = vmatprep.subr.bf16.mxu0 0
    %1565 = vmatpush1.bf16.msra.mxu0 0
    %1566 = vmatprep.subr.bf16.mxu0 0
    %1567 = vmatpush1.bf16.msra.mxu0 0
    %1568 = vmatprep.subr.bf16.mxu0 0
    %1569 = vmatpush1.bf16.msra.mxu0 0
    %1570 = vmatprep.subr.bf16.mxu0 0
    %1571 = vmatpush1.bf16.msra.mxu0 0
    %1572 = vmatprep.subr.bf16.mxu0 0
    %1573 = vmatpush1.bf16.msra.mxu0 0
    %1574 = vmatprep.subr.bf16.mxu0 0
    %1575 = vmatpush1.bf16.msra.mxu0 0
    %1576 = vmatprep.subr.bf16.mxu0 0
    %1577 = vmatpush1.bf16.msra.mxu0 0
    %1578 = vmatprep.subr.bf16.mxu0 0
    %1579 = vmatpush1.bf16.msra.mxu0 0
    %1580 = vmatprep.subr.bf16.mxu0 0
    %1581 = vmatpush1.bf16.msra.mxu0 0
    %1582 = vmatprep.subr.bf16.mxu0 0
    %1583 = vmatpush1.bf16.msra.mxu0 0
    %1584 = vmatprep.subr.bf16.mxu0 0
    %1585 = vmatpush1.bf16.msra.mxu0 0
    %1586 = vmatprep.subr.bf16.mxu0 0
    %1587 = vmatpush1.bf16.msra.mxu0 0
    %1588 = vmatprep.subr.bf16.mxu0 0
    %1589 = vmatpush1.bf16.msra.mxu0 0
    %1590 = vmatprep.subr.bf16.mxu0 0
    %1591 = vmatpush1.bf16.msra.mxu0 0
    %1592 = vmatprep.mubr.bf16.mxu0 0
    %1593 = vmatmul.mubr.bf16.gmra.mrb[0].mxu0 %v1257
    %v1594 = vpop.f32.mrb[0].mxu0
    %v1595 = vadd.f32 %v1552, %v1594
    %v1596 = vpop.f32.mrb[0].mxu0
    %v1597 = vadd.f32 %v1554, %v1596
    %v1598 = vpop.f32.mrb[0].mxu0
    %v1599 = vadd.f32 %v1556, %v1598
    %v1600 = vpop.f32.mrb[0].mxu0
    %v1601 = vadd.f32 %v1558, %v1600
    %1602 = vdwg.mxu0
    %v1603 = vtanh.pop %v1423
    %v1604 = vtanh.pop %v1425
    %v1605 = vtanh.pop %v1595
    %v1606 = vtanh.pop %v1597
    %v1607 = vtanh.pop %v1427
    %v1608 = vtanh.pop %v1429
    %v1609 = vtanh.pop %v1599
    %v1610 = vtanh.pop %v1601
    %v1611 = vpack.c.bf16 %v1607, %v1603
    %v1612 = vpack.c.bf16 %v1608, %v1604
    %v1613 = vpack.c.bf16 %v1609, %v1605
    %v1614 = vpack.c.bf16 %v1610, %v1606
    %v1615 = vld [vmem:[#allocation2] sm:$0xf]
    %v1616 = vld [vmem:[#allocation2 + $0x4] sm:$0xf]
    %v1617 = vld [vmem:[#allocation2 + $0x8] sm:$0xf]
    %v1618 = vld [vmem:[#allocation2 + $0xc] sm:$0xf]
    %v1619 = vld [vmem:[#allocation2 + $0x10] sm:$0xf]
    %v1620 = vld [vmem:[#allocation2 + $0x14] sm:$0xf]
    %v1621 = vld [vmem:[#allocation2 + $0x18] sm:$0xf]
    %v1622 = vld [vmem:[#allocation2 + $0x1c] sm:$0xf]
    %v1623 = vld [vmem:[#allocation2 + $0x20] sm:$0xf]
    %v1624 = vld [vmem:[#allocation2 + $0x24] sm:$0xf]
    %v1625 = vld [vmem:[#allocation2 + $0x28] sm:$0xf]
    %v1626 = vld [vmem:[#allocation2 + $0x2c] sm:$0xf]
    %v1627 = vld [vmem:[#allocation2 + $0x30] sm:$0xf]
    %v1628 = vld [vmem:[#allocation2 + $0x34] sm:$0xf]
    %v1629 = vld [vmem:[#allocation2 + $0x38] sm:$0xf]
    %v1630 = vld [vmem:[#allocation2 + $0x3c] sm:$0xf]
    %v1631 = vld [vmem:[#allocation2 + $0x40] sm:$0xf]
    %v1632 = vld [vmem:[#allocation2 + $0x44] sm:$0xf]
    %v1633 = vld [vmem:[#allocation2 + $0x48] sm:$0xf]
    %v1634 = vld [vmem:[#allocation2 + $0x4c] sm:$0xf]
    %v1635 = vld [vmem:[#allocation2 + $0x50] sm:$0xf]
    %v1636 = vld [vmem:[#allocation2 + $0x54] sm:$0xf]
    %v1637 = vld [vmem:[#allocation2 + $0x58] sm:$0xf]
    %v1638 = vld [vmem:[#allocation2 + $0x5c] sm:$0xf]
    %v1639 = vld [vmem:[#allocation2 + $0x60] sm:$0xf]
    %v1640 = vld [vmem:[#allocation2 + $0x64] sm:$0xf]
    %v1641 = vld [vmem:[#allocation2 + $0x68] sm:$0xf]
    %v1642 = vld [vmem:[#allocation2 + $0x6c] sm:$0xf]
    %v1643 = vld [vmem:[#allocation2 + $0x70] sm:$0xf]
    %v1644 = vld [vmem:[#allocation2 + $0x74] sm:$0xf]
    %v1645 = vld [vmem:[#allocation2 + $0x78] sm:$0xf]
    %v1646 = vld [vmem:[#allocation2 + $0x7c] sm:$0xf]
    %v1647 = vld [vmem:[#allocation2 + $0x80] sm:$0xf]
    %v1648 = vld [vmem:[#allocation2 + $0x84] sm:$0xf]
    %v1649 = vld [vmem:[#allocation2 + $0x88] sm:$0xf]
    %v1650 = vld [vmem:[#allocation2 + $0x8c] sm:$0xf]
    %v1651 = vld [vmem:[#allocation2 + $0x90] sm:$0xf]
    %v1652 = vld [vmem:[#allocation2 + $0x94] sm:$0xf]
    %v1653 = vld [vmem:[#allocation2 + $0x98] sm:$0xf]
    %v1654 = vld [vmem:[#allocation2 + $0x9c] sm:$0xf]
    %v1655 = vld [vmem:[#allocation2 + $0xa0] sm:$0xf]
    %v1656 = vld [vmem:[#allocation2 + $0xa4] sm:$0xf]
    %v1657 = vld [vmem:[#allocation2 + $0xa8] sm:$0xf]
    %v1658 = vld [vmem:[#allocation2 + $0xac] sm:$0xf]
    %v1659 = vld [vmem:[#allocation2 + $0xb0] sm:$0xf]
    %v1660 = vld [vmem:[#allocation2 + $0xb4] sm:$0xf]
    %v1661 = vld [vmem:[#allocation2 + $0xb8] sm:$0xf]
    %v1662 = vld [vmem:[#allocation2 + $0xbc] sm:$0xf]
    %v1663 = vld [vmem:[#allocation2 + $0xc0] sm:$0xf]
    %v1664 = vld [vmem:[#allocation2 + $0xc4] sm:$0xf]
    %v1665 = vld [vmem:[#allocation2 + $0xc8] sm:$0xf]
    %v1666 = vld [vmem:[#allocation2 + $0xcc] sm:$0xf]
    %v1667 = vld [vmem:[#allocation2 + $0xd0] sm:$0xf]
    %v1668 = vld [vmem:[#allocation2 + $0xd4] sm:$0xf]
    %v1669 = vld [vmem:[#allocation2 + $0xd8] sm:$0xf]
    %v1670 = vld [vmem:[#allocation2 + $0xdc] sm:$0xf]
    %v1671 = vld [vmem:[#allocation2 + $0xe0] sm:$0xf]
    %v1672 = vld [vmem:[#allocation2 + $0xe4] sm:$0xf]
    %v1673 = vld [vmem:[#allocation2 + $0xe8] sm:$0xf]
    %v1674 = vld [vmem:[#allocation2 + $0xec] sm:$0xf]
    %v1675 = vld [vmem:[#allocation2 + $0xf0] sm:$0xf]
    %v1676 = vld [vmem:[#allocation2 + $0xf4] sm:$0xf]
    %v1677 = vld [vmem:[#allocation2 + $0xf8] sm:$0xf]
    %v1678 = vld [vmem:[#allocation2 + $0xfc] sm:$0xf]
    %v1679 = vld [vmem:[%s4] sm:$0x1]
    %v1681 = vlaneseq
    %v1682 = vshrl.u32 %v1681, 7
    %v1683 = vsub.s32 0, %v1682
    %v1684 = vrot.slane %v1679, %v1683
    %v1750 = vunpack.c.l.b16 %v1615
    %v1751 = vunpack.c.l.b16 %v1616
    %v1752 = vunpack.c.l.b16 %v1617
    %v1753 = vunpack.c.l.b16 %v1618
    %v1754 = vunpack.c.l.b16 %v1619
    %v1755 = vunpack.c.l.b16 %v1620
    %v1756 = vunpack.c.l.b16 %v1621
    %v1757 = vunpack.c.l.b16 %v1622
    %v1758 = vunpack.c.l.b16 %v1623
    %v1759 = vunpack.c.l.b16 %v1624
    %v1760 = vunpack.c.l.b16 %v1625
    %v1761 = vunpack.c.l.b16 %v1626
    %v1762 = vunpack.c.l.b16 %v1627
    %v1763 = vunpack.c.l.b16 %v1628
    %v1764 = vunpack.c.l.b16 %v1629
    %v1765 = vunpack.c.l.b16 %v1630
    %v1766 = vunpack.c.l.b16 %v1631
    %v1767 = vunpack.c.l.b16 %v1632
    %v1768 = vunpack.c.l.b16 %v1633
    %v1769 = vunpack.c.l.b16 %v1634
    %v1770 = vunpack.c.l.b16 %v1635
    %v1771 = vunpack.c.l.b16 %v1636
    %v1772 = vunpack.c.l.b16 %v1637
    %v1773 = vunpack.c.l.b16 %v1638
    %v1774 = vunpack.c.l.b16 %v1639
    %v1775 = vunpack.c.l.b16 %v1640
    %v1776 = vunpack.c.l.b16 %v1641
    %v1777 = vunpack.c.l.b16 %v1642
    %v1778 = vunpack.c.l.b16 %v1643
    %v1779 = vunpack.c.l.b16 %v1644
    %v1780 = vunpack.c.l.b16 %v1645
    %v1781 = vunpack.c.l.b16 %v1646
    %v1782 = vunpack.c.l.b16 %v1647
    %v1783 = vunpack.c.l.b16 %v1648
    %v1784 = vunpack.c.l.b16 %v1649
    %v1785 = vunpack.c.l.b16 %v1650
    %v1786 = vunpack.c.l.b16 %v1651
    %v1787 = vunpack.c.l.b16 %v1652
    %v1788 = vunpack.c.l.b16 %v1653
    %v1789 = vunpack.c.l.b16 %v1654
    %v1790 = vunpack.c.l.b16 %v1655
    %v1791 = vunpack.c.l.b16 %v1656
    %v1792 = vunpack.c.l.b16 %v1657
    %v1793 = vunpack.c.l.b16 %v1658
    %v1794 = vunpack.c.l.b16 %v1659
    %v1795 = vunpack.c.l.b16 %v1660
    %v1796 = vunpack.c.l.b16 %v1661
    %v1797 = vunpack.c.l.b16 %v1662
    %v1798 = vunpack.c.l.b16 %v1663
    %v1799 = vunpack.c.l.b16 %v1664
    %v1800 = vunpack.c.l.b16 %v1665
    %v1801 = vunpack.c.l.b16 %v1666
    %v1802 = vunpack.c.l.b16 %v1667
    %v1803 = vunpack.c.l.b16 %v1668
    %v1804 = vunpack.c.l.b16 %v1669
    %v1805 = vunpack.c.l.b16 %v1670
    %v1806 = vunpack.c.l.b16 %v1671
    %v1807 = vunpack.c.l.b16 %v1672
    %v1808 = vunpack.c.l.b16 %v1673
    %v1809 = vunpack.c.l.b16 %v1674
    %v1810 = vunpack.c.l.b16 %v1675
    %v1811 = vunpack.c.l.b16 %v1676
    %v1812 = vunpack.c.l.b16 %v1677
    %v1813 = vunpack.c.l.b16 %v1678
    %v1814 = vpack.c.b16 %v1751, %v1750
    %v1815 = vpack.c.b16 %v1753, %v1752
    %v1816 = vpack.c.b16 %v1755, %v1754
    %v1817 = vpack.c.b16 %v1757, %v1756
    %v1818 = vpack.c.b16 %v1759, %v1758
    %v1819 = vpack.c.b16 %v1761, %v1760
    %v1820 = vpack.c.b16 %v1763, %v1762
    %v1821 = vpack.c.b16 %v1765, %v1764
    %v1822 = vpack.c.b16 %v1767, %v1766
    %v1823 = vpack.c.b16 %v1769, %v1768
    %v1824 = vpack.c.b16 %v1771, %v1770
    %v1825 = vpack.c.b16 %v1773, %v1772
    %v1826 = vpack.c.b16 %v1775, %v1774
    %v1827 = vpack.c.b16 %v1777, %v1776
    %v1828 = vpack.c.b16 %v1779, %v1778
    %v1829 = vpack.c.b16 %v1781, %v1780
    %v1830 = vpack.c.b16 %v1783, %v1782
    %v1831 = vpack.c.b16 %v1785, %v1784
    %v1832 = vpack.c.b16 %v1787, %v1786
    %v1833 = vpack.c.b16 %v1789, %v1788
    %v1834 = vpack.c.b16 %v1791, %v1790
    %v1835 = vpack.c.b16 %v1793, %v1792
    %v1836 = vpack.c.b16 %v1795, %v1794
    %v1837 = vpack.c.b16 %v1797, %v1796
    %v1838 = vpack.c.b16 %v1799, %v1798
    %v1839 = vpack.c.b16 %v1801, %v1800
    %v1840 = vpack.c.b16 %v1803, %v1802
    %v1841 = vpack.c.b16 %v1805, %v1804
    %v1842 = vpack.c.b16 %v1807, %v1806
    %v1843 = vpack.c.b16 %v1809, %v1808
    %v1844 = vpack.c.b16 %v1811, %v1810
    %v1845 = vpack.c.b16 %v1813, %v1812
    %1878 = vmatprep.subr.bf16.mxu0 0
    %1879 = vmatpush1.bf16.msra.mxu0 %v1814
    %1880 = vmatprep.subr.bf16.mxu0 0
    %1881 = vmatpush1.bf16.msra.mxu0 %v1815
    %1882 = vmatprep.subr.bf16.mxu0 0
    %1883 = vmatpush1.bf16.msra.mxu0 %v1816
    %1884 = vmatprep.subr.bf16.mxu0 0
    %1885 = vmatpush1.bf16.msra.mxu0 %v1817
    %1886 = vmatprep.subr.bf16.mxu0 0
    %1887 = vmatpush1.bf16.msra.mxu0 %v1818
    %1888 = vmatprep.subr.bf16.mxu0 0
    %1889 = vmatpush1.bf16.msra.mxu0 %v1819
    %1890 = vmatprep.subr.bf16.mxu0 0
    %1891 = vmatpush1.bf16.msra.mxu0 %v1820
    %1892 = vmatprep.subr.bf16.mxu0 0
    %1893 = vmatpush1.bf16.msra.mxu0 %v1821
    %1894 = vmatprep.subr.bf16.mxu0 0
    %1895 = vmatpush1.bf16.msra.mxu0 %v1822
    %1896 = vmatprep.subr.bf16.mxu0 0
    %1897 = vmatpush1.bf16.msra.mxu0 %v1823
    %1898 = vmatprep.subr.bf16.mxu0 0
    %1899 = vmatpush1.bf16.msra.mxu0 %v1824
    %1900 = vmatprep.subr.bf16.mxu0 0
    %1901 = vmatpush1.bf16.msra.mxu0 %v1825
    %1902 = vmatprep.subr.bf16.mxu0 0
    %1903 = vmatpush1.bf16.msra.mxu0 %v1826
    %1904 = vmatprep.subr.bf16.mxu0 0
    %1905 = vmatpush1.bf16.msra.mxu0 %v1827
    %1906 = vmatprep.subr.bf16.mxu0 0
    %1907 = vmatpush1.bf16.msra.mxu0 %v1828
    %1908 = vmatprep.subr.bf16.mxu0 0
    %1909 = vmatpush1.bf16.msra.mxu0 %v1829
    %1910 = vmatprep.mubr.bf16.mxu0 %v1612
    %1911 = vmatmul.mubr.bf16.gmra.mrb[0].mxu0 %v1611
    %v1912 = vpop.f32.mrb[0].mxu0
    %v1913 = vadd.f32 %v1684, %v1912
    %v1914 = vpop.f32.mrb[0].mxu0
    %v1915 = vpop.f32.mrb[0].mxu0
    %v1916 = vadd.f32 %v1684, %v1915
    %v1917 = vpop.f32.mrb[0].mxu0
    %1918 = vdwg.mxu0
    %1919 = vmatprep.subr.bf16.mxu0 0
    %1920 = vmatpush1.bf16.msra.mxu0 %v1830
    %1921 = vmatprep.subr.bf16.mxu0 0
    %1922 = vmatpush1.bf16.msra.mxu0 %v1831
    %1923 = vmatprep.subr.bf16.mxu0 0
    %1924 = vmatpush1.bf16.msra.mxu0 %v1832
    %1925 = vmatprep.subr.bf16.mxu0 0
    %1926 = vmatpush1.bf16.msra.mxu0 %v1833
    %1927 = vmatprep.subr.bf16.mxu0 0
    %1928 = vmatpush1.bf16.msra.mxu0 %v1834
    %1929 = vmatprep.subr.bf16.mxu0 0
    %1930 = vmatpush1.bf16.msra.mxu0 %v1835
    %1931 = vmatprep.subr.bf16.mxu0 0
    %1932 = vmatpush1.bf16.msra.mxu0 %v1836
    %1933 = vmatprep.subr.bf16.mxu0 0
    %1934 = vmatpush1.bf16.msra.mxu0 %v1837
    %1935 = vmatprep.subr.bf16.mxu0 0
    %1936 = vmatpush1.bf16.msra.mxu0 %v1838
    %1937 = vmatprep.subr.bf16.mxu0 0
    %1938 = vmatpush1.bf16.msra.mxu0 %v1839
    %1939 = vmatprep.subr.bf16.mxu0 0
    %1940 = vmatpush1.bf16.msra.mxu0 %v1840
    %1941 = vmatprep.subr.bf16.mxu0 0
    %1942 = vmatpush1.bf16.msra.mxu0 %v1841
    %1943 = vmatprep.subr.bf16.mxu0 0
    %1944 = vmatpush1.bf16.msra.mxu0 %v1842
    %1945 = vmatprep.subr.bf16.mxu0 0
    %1946 = vmatpush1.bf16.msra.mxu0 %v1843
    %1947 = vmatprep.subr.bf16.mxu0 0
    %1948 = vmatpush1.bf16.msra.mxu0 %v1844
    %1949 = vmatprep.subr.bf16.mxu0 0
    %1950 = vmatpush1.bf16.msra.mxu0 %v1845
    %1951 = vmatprep.mubr.bf16.mxu0 %v1614
    %1952 = vmatmul.mubr.bf16.gmra.mrb[0].mxu0 %v1613
    %v1953 = vpop.f32.mrb[0].mxu0
    %v1954 = vadd.f32 %v1913, %v1953
    %v1955 = vpop.f32.mrb[0].mxu0
    %v1956 = vpop.f32.mrb[0].mxu0
    %v1957 = vadd.f32 %v1916, %v1956
    %v1958 = vpop.f32.mrb[0].mxu0
    %1959 = vdwg.mxu0
    %1960 = vmax.xlane.f32.xlu0 %v1954
    %v1961 = vpop.xlane.xlu0 %1960
    %1962 = vmax.xlane.f32.xlu0 %v1957
    %v1963 = vpop.xlane.xlu0 %1962
    %v1964 = vsub.f32 %v1954, %v1961
    %v1965 = vsub.f32 %v1957, %v1963
    %v1966 = vmul.f32 %v1964, 1.442695
    %v1967 = vpow.pop %v1966
    %v1968 = vmul.f32 %v1965, 1.442695
    %v1969 = vpow.pop %v1968
    %1970 = vadd.xlane.f32.xlu0 %v1967
    %v1971 = vpop.xlane.xlu0 %1970
    %1972 = vadd.xlane.f32.xlu0 %v1969
    %v1973 = vpop.xlane.xlu0 %1972
    %v1974 = vlog2.pop %v1971
    %v1975 = vmul.f32 %v1974, 0.6931472
    %v1976 = vlog2.pop %v1973
    %v1977 = vmul.f32 %v1976, 0.6931472
    %v1978 = vsub.f32 %v1964, %v1975
    %v1979 = vsub.f32 %v1965, %v1977
    %vm1980 = vcmask 80896
    %1981 = vst.msk [vmem:[#allocation5] sm:$0xff] %vm1980, %v1978
    %1982 = vst.msk [vmem:[#allocation5 + $0x8] sm:$0xff] %vm1980, %v1979
    // Predicated region
    $region26: #{netfull_forward.1} parent=1 // pred_check
      _
    $region27: #{netfull_forward.1} parent=1 // pred_check_branch
      %1984 = sbr.rel (0) target = $region29
    $region28: #{netfull_forward.1} parent=1 // pred_region
      %s1986 = ssub.s32 256, 256
      %1987 = vsyncadd [#allocation4], %s1986
      %s1988 = sshll.u32 [#allocation5], 4
      %s1989 = int_to_ptr.vmem [resolvable:$true] %s1988
      %1994 = dma.vmem_to_hbm [thread:$0]  %s1989, 256, %s5, [#allocation4], 128, 128, 8
    $region29: #{netfull_forward.1} parent=1 // pred_fallthru
      _
    // Predicated region
    $region30: #{netfull_forward.1} parent=1 // pred_check
      _
    $region31: #{netfull_forward.1} parent=1 // pred_check_branch
      %1996 = sbr.rel (0) target = $region33
    $region32: #{netfull_forward.1} parent=1 // pred_region
      %1997 = dma.done [#allocation4], 256
    $region33: #{netfull_forward.1} parent=1 // pred_fallthru
      _
    %1998 = vsyncpa [#allocation3], 1
    %1999 = vsyncpa [#allocation4], 1

</llo_original>
